<compile_context>
chip_gen: v6e
topology: v6e:2x2x1
jax: 0.10.0
libtpu: 0.0.40
codegen_flags: <defaults>
</compile_context>

<pallas_src>
import math
import functools

import jax
import jax.numpy as jnp
import numpy as np
from jax.experimental import pallas as pl
from jax.experimental.pallas import tpu as pltpu

NUM_HEADS = 4
LN_EPS = 1e-5


def mvca_kernel(q_ref, k_ref, v_ref,
                wq_ref, bq_ref, wk_ref, bk_ref, wv_ref, bv_ref,
                wo_ref, bo_ref, gamma_ref, beta_ref,
                out_ref, ctx_ref, *, bb, lq, lk):
    """One block of `bb` batch elements per grid step; rows pre-flattened to
    (bb*L, D) so the projection / output matmuls see a fat M dimension."""
    e = wq_ref.shape[1]
    hd = e // NUM_HEADS
    scale = 1.0 / math.sqrt(hd)

    # ---- Input projections: bf16 activations straight from HBM, f32 accumulate.
    q = jnp.dot(q_ref[...], wq_ref[...], preferred_element_type=jnp.float32) + bq_ref[...]
    k = jnp.dot(k_ref[...], wk_ref[...], preferred_element_type=jnp.float32) + bk_ref[...]
    v = jnp.dot(v_ref[...], wv_ref[...], preferred_element_type=jnp.float32) + bv_ref[...]

    # bf16 right after the bias add; per-batch 3-D views (leading-dim split).
    q3 = q.astype(jnp.bfloat16).reshape(bb, lq, e)
    k3 = k.astype(jnp.bfloat16).reshape(bb, lk, e)
    v3 = v.astype(jnp.bfloat16).reshape(bb, lk, e)

    # ---- Per-head attention.  Context for every head goes into a full-width
    # VMEM slab so the output projection below is a single K=E MXU matmul.
    for h in range(NUM_HEADS):
        sl = slice(h * hd, (h + 1) * hd)
        qh = q3[:, :, sl]                                       # (bb, lq, hd) bf16
        kh = k3[:, :, sl]                                       # (bb, lk, hd) bf16
        vh = v3[:, :, sl]                                       # (bb, lk, hd) bf16

        # Scores contract the last dims directly (no explicit k transpose).
        s = jnp.einsum('bqd,bkd->bqk', qh, kh,
                       preferred_element_type=jnp.float32) * scale   # (bb,lq,lk) f32
        s = s - jnp.max(s, axis=-1, keepdims=True)
        p = jnp.exp(s)                                          # EUP
        inv = pl.reciprocal(jnp.sum(p, axis=-1, keepdims=True), approx=True)
        w = (p * inv).astype(jnp.bfloat16)                      # softmax weights

        ctx = jnp.einsum('bqk,bkd->bqd', w, vh,
                         preferred_element_type=jnp.float32)    # (bb, lq, hd) f32
        ctx_ref[:, sl] = ctx.reshape(bb * lq, hd)

    # ---- Output projection: ONE (bb*lq, E) @ (E, E) matmul (full MXU depth).
    out = jnp.dot(ctx_ref[...].astype(jnp.bfloat16), wo_ref[...],
                  preferred_element_type=jnp.float32) + bo_ref[...]

    # ---- LayerNorm over the feature dim (f32), single-pass variance.
    mu = jnp.mean(out, axis=-1, keepdims=True)
    ex2 = jnp.mean(out * out, axis=-1, keepdims=True)
    var = jnp.maximum(ex2 - mu * mu, 0.0)
    normed = (out - mu) * jax.lax.rsqrt(var + LN_EPS)
    out_ref[...] = normed * gamma_ref[...] + beta_ref[...]


def _pick_batch_block(B, LQ, LK, target_rows=512):
    """Largest-divisor batch block with:
       * bb*LQ / bb*LK multiples of 16 (bf16 sublane packing -> legal blocks),
       * >= 2 grid steps when possible (feeds both v7x TensorCores),
       * bb*LQ as close to ~target_rows as the above allow (DMA efficiency)."""
    divs = [d for d in range(1, B + 1) if B % d == 0]

    def rows_ok(d):
        return (d * LQ) % 16 == 0 and (d * LK) % 16 == 0

    multi = [d for d in divs if d < B and rows_ok(d)]     # keep >= 2 grid steps
    cands = multi if multi else [d for d in divs if rows_ok(d)]
    if not cands:
        return B                                          # full-array block (always legal)
    return min(cands, key=lambda d: (abs(d * LQ - target_rows), -d))


def _vmem_limit_bytes(bb, LQ, LK, DQ, DK, E):
    """Derive the scoped-VMEM request from the real buffer budget; clamp to
    3/4 of physical VMEM (48 MiB fallback keeps v7x's 64 MiB/TC safe)."""
    act_in = 2 * 2 * (bb * LQ * DQ + 2 * bb * LK * DK)        # bf16, double-buffered
    act_out = 2 * 4 * bb * LQ * E                             # f32, double-buffered
    weights = 2 * 2 * (DQ * E + 2 * DK * E + E * E)           # bf16 (+ 2nd buffer)
    smalls = 2 * 4 * 6 * E                                    # biases / gamma / beta
    scratch = 4 * bb * LQ * E                                 # ctx slab
    working = 4 * 4 * bb * max(LQ, LK) * E                    # live intermediates headroom
    need = act_in + act_out + weights + smalls + scratch + working
    try:
        cap = int(pltpu.get_tpu_info().vmem_capacity_bytes)   # 128 MiB v5e/v6e, 64 MiB v7x
    except Exception:
        cap = 64 << 20
    cap = cap * 3 // 4
    return int(min(max(2 * need, 32 << 20), cap))


@jax.jit
def multi_view_cross_attention(Q, K, V, params):
    B, LQ, DQ = Q.shape
    _, LK, DK = K.shape
    E = params["wq"].shape[1]
    hd = E // NUM_HEADS

    # TODO(synk): pad ragged sequence lengths to multiples of 8 if needed.
    assert LQ % 8 == 0 and LK % 8 == 0

    bb = _pick_batch_block(B, LQ, LK)
    nb = B // bb

    # Flatten batch into the row (sublane / MXU-M) dimension and hand the
    # kernel bf16 activations (halves DMA + input double-buffer VMEM).
    Q2 = Q.reshape(B * LQ, DQ).astype(jnp.bfloat16)
    K2 = K.reshape(B * LK, DK).astype(jnp.bfloat16)
    V2 = V.reshape(B * LK, DK).astype(jnp.bfloat16)

    # Weights resident in bf16 (MXU inputs).
    wq = params["wq"].astype(jnp.bfloat16)
    wk = params["wk"].astype(jnp.bfloat16)
    wv = params["wv"].astype(jnp.bfloat16)
    wo = params["wo"].astype(jnp.bfloat16)

    const2d = lambda shape: pl.BlockSpec(shape, lambda b: (0, 0))

    cost = pl.CostEstimate(
        flops=int(2 * B * (LQ * DQ * E + 2 * LK * DK * E
                           + 2 * NUM_HEADS * LQ * LK * hd + LQ * E * E)),
        transcendentals=int(B * NUM_HEADS * LQ * LK),
        bytes_accessed=int(2 * (B * LQ * DQ + 2 * B * LK * DK)      # bf16 activations in
                           + 4 * B * LQ * E                          # f32 output
                           + 2 * (DQ * E + 2 * DK * E + E * E)       # bf16 weights
                           + 4 * 6 * E),
    )

    kernel = functools.partial(mvca_kernel, bb=bb, lq=LQ, lk=LK)

    out2 = pl.pallas_call(
        kernel,
        out_shape=jax.ShapeDtypeStruct((B * LQ, E), jnp.float32),
        grid_spec=pltpu.PrefetchScalarGridSpec(
            num_scalar_prefetch=0,
            grid=(nb,),
            in_specs=[
                pl.BlockSpec((bb * LQ, DQ), lambda b: (b, 0)),
                pl.BlockSpec((bb * LK, DK), lambda b: (b, 0)),
                pl.BlockSpec((bb * LK, DK), lambda b: (b, 0)),
                const2d((DQ, E)), const2d((1, E)),   # wq, bq
                const2d((DK, E)), const2d((1, E)),   # wk, bk
                const2d((DK, E)), const2d((1, E)),   # wv, bv
                const2d((E, E)), const2d((1, E)),    # wo, bo
                const2d((1, E)), const2d((1, E)),    # gamma, beta
            ],
            out_specs=pl.BlockSpec((bb * LQ, E), lambda b: (b, 0)),
            scratch_shapes=[pltpu.VMEM((bb * LQ, E), jnp.float32)],  # ctx slab
        ),
        compiler_params=pltpu.CompilerParams(
            dimension_semantics=("parallel",),
            vmem_limit_bytes=_vmem_limit_bytes(bb, LQ, LK, DQ, DK, E)),
        cost_estimate=cost,
    )(Q2, K2, V2,
      wq, params["bq"], wk, params["bk"], wv, params["bv"],
      wo, params["bo"], params["gamma"], params["beta"])

    return out2.reshape(B, LQ, E)


def reference_jax(Q, K, V, params):
    """Pure-JAX f32 reference mirroring the PyTorch forward (dropout = identity)."""
    B = Q.shape[0]
    E = params["wq"].shape[1]
    H = NUM_HEADS
    hd = E // H
    q = Q @ params["wq"] + params["bq"][0]
    k = K @ params["wk"] + params["bk"][0]
    v = V @ params["wv"] + params["bv"][0]
    q = q.reshape(B, -1, H, hd).transpose(0, 2, 1, 3)
    k = k.reshape(B, -1, H, hd).transpose(0, 2, 1, 3)
    v = v.reshape(B, -1, H, hd).transpose(0, 2, 1, 3)
    s = jnp.einsum("bhqd,bhkd->bhqk", q, k) / math.sqrt(hd)
    w = jax.nn.softmax(s, axis=-1)
    ctx = jnp.einsum("bhqk,bhkd->bhqd", w, v)
    ctx = ctx.transpose(0, 2, 1, 3).reshape(B, -1, E)
    out = ctx @ params["wo"] + params["bo"][0]
    mu = out.mean(-1, keepdims=True)
    var = ((out - mu) ** 2).mean(-1, keepdims=True)
    return (out - mu) * jax.lax.rsqrt(var + LN_EPS) * params["gamma"][0] + params["beta"][0]


def init_params(key, embed_dim, cls_dim=None):
    """Deterministic init mimicking nn.Linear default (uniform +-1/sqrt(fan_in)),
    weights stored pre-transposed as (in_features, out_features)."""
    kin = cls_dim if cls_dim else embed_dim
    keys = jax.random.split(key, 8)

    def lin(kw, kb, fan_in, fan_out):
        bound = 1.0 / math.sqrt(fan_in)
        w = jax.random.uniform(kw, (fan_in, fan_out), jnp.float32, -bound, bound)
        b = jax.random.uniform(kb, (1, fan_out), jnp.float32, -bound, bound)
        return w, b

    wq, bq = lin(keys[0], keys[1], embed_dim, embed_dim)
    wk, bk = lin(keys[2], keys[3], kin, embed_dim)
    wv, bv = lin(keys[4], keys[5], kin, embed_dim)
    wo, bo = lin(keys[6], keys[7], embed_dim, embed_dim)
    return dict(wq=wq, bq=bq, wk=wk, bk=bk, wv=wv, bv=bv, wo=wo, bo=bo,
                gamma=jnp.ones((1, embed_dim), jnp.float32),
                beta=jnp.zeros((1, embed_dim), jnp.float32))


if __name__ == "__main__":
    B, LQ, LK = 2, 8, 8
    EMBED_DIM = 32          # 4 heads x head_dim 8
    CLS_DIM = None          # K/V input dim == embed_dim

    key = jax.random.PRNGKey(0)
    kq, kk, kv, kp = jax.random.split(key, 4)
    kin = CLS_DIM if CLS_DIM else EMBED_DIM
    Q = jax.random.normal(kq, (B, LQ, EMBED_DIM), jnp.float32)
    K = jax.random.normal(kk, (B, LK, kin), jnp.float32)
    V = jax.random.normal(kv, (B, LK, kin), jnp.float32)
    params = init_params(kp, EMBED_DIM, CLS_DIM)

    out = multi_view_cross_attention(Q, K, V, params)
    out = jax.block_until_ready(out)

    ref = reference_jax(Q, K, V, params)
    # bf16 activations + bf16 weights on the MXU (f32 accumulate) and the
    # approx softmax reciprocal vs the pure-f32 reference -> loosened tol.
    np.testing.assert_allclose(np.asarray(out), np.asarray(ref), rtol=5e-2, atol=5e-2)

    print("KERNEL_OK")
</pallas_src>

<mosaic_0001>
module attributes {stable_mosaic.version = 11 : i64} {
  func.func @mvca_kernel(%arg0: i32, %arg1: memref<16x32xbf16, #tpu.memory_space<vmem>>, %arg2: memref<16x32xbf16, #tpu.memory_space<vmem>>, %arg3: memref<16x32xbf16, #tpu.memory_space<vmem>>, %arg4: memref<32x32xbf16, #tpu.memory_space<vmem>>, %arg5: memref<1x32xf32, #tpu.memory_space<vmem>>, %arg6: memref<32x32xbf16, #tpu.memory_space<vmem>>, %arg7: memref<1x32xf32, #tpu.memory_space<vmem>>, %arg8: memref<32x32xbf16, #tpu.memory_space<vmem>>, %arg9: memref<1x32xf32, #tpu.memory_space<vmem>>, %arg10: memref<32x32xbf16, #tpu.memory_space<vmem>>, %arg11: memref<1x32xf32, #tpu.memory_space<vmem>>, %arg12: memref<1x32xf32, #tpu.memory_space<vmem>>, %arg13: memref<1x32xf32, #tpu.memory_space<vmem>>, %arg14: memref<16x32xf32, #tpu.memory_space<vmem>>, %arg15: memref<16x32xf32, #tpu.memory_space<vmem>>) attributes {dimension_semantics = [#tpu.dimension_semantics<parallel>], iteration_bounds = array<i64: 1>, scalar_prefetch = 0 : i64, scratch_operands = 1 : i64, tpu.core_type = #tpu.core_type<tc>, window_params = [{transform_indices = @transform_0, window_bounds = array<i64: 16, 32>}, {transform_indices = @transform_1, window_bounds = array<i64: 16, 32>}, {transform_indices = @transform_2, window_bounds = array<i64: 16, 32>}, {pipeline_mode = #tpu.pipeline_mode<synchronous>, transform_indices = @transform_3, window_bounds = array<i64: 32, 32>}, {pipeline_mode = #tpu.pipeline_mode<synchronous>, transform_indices = @transform_4, window_bounds = array<i64: 1, 32>}, {pipeline_mode = #tpu.pipeline_mode<synchronous>, transform_indices = @transform_5, window_bounds = array<i64: 32, 32>}, {pipeline_mode = #tpu.pipeline_mode<synchronous>, transform_indices = @transform_6, window_bounds = array<i64: 1, 32>}, {pipeline_mode = #tpu.pipeline_mode<synchronous>, transform_indices = @transform_7, window_bounds = array<i64: 32, 32>}, {pipeline_mode = #tpu.pipeline_mode<synchronous>, transform_indices = @transform_8, window_bounds = array<i64: 1, 32>}, {pipeline_mode = #tpu.pipeline_mode<synchronous>, transform_indices = @transform_9, window_bounds = array<i64: 32, 32>}, {pipeline_mode = #tpu.pipeline_mode<synchronous>, transform_indices = @transform_10, window_bounds = array<i64: 1, 32>}, {pipeline_mode = #tpu.pipeline_mode<synchronous>, transform_indices = @transform_11, window_bounds = array<i64: 1, 32>}, {pipeline_mode = #tpu.pipeline_mode<synchronous>, transform_indices = @transform_12, window_bounds = array<i64: 1, 32>}, {transform_indices = @transform_13, window_bounds = array<i64: 16, 32>}]} {
    %c0 = arith.constant 0 : index
    %c0_0 = arith.constant 0 : index
    %0 = vector.load %arg1[%c0, %c0_0] : memref<16x32xbf16, #tpu.memory_space<vmem>>, vector<16x32xbf16>
    %c0_1 = arith.constant 0 : index
    %c0_2 = arith.constant 0 : index
    %1 = vector.load %arg4[%c0_1, %c0_2] : memref<32x32xbf16, #tpu.memory_space<vmem>>, vector<32x32xbf16>
    %cst = arith.constant dense<0.000000e+00> : vector<16x32xf32>
    %2 = tpu.matmul %0, %1, %cst {dimension_numbers = #tpu.dot_dimension_numbers<[1], [0], [0], [1], [0, 0, 1, 1], [], []>} : vector<16x32xbf16>, vector<32x32xbf16>, vector<16x32xf32> -> vector<16x32xf32>
    %c0_3 = arith.constant 0 : index
    %c0_4 = arith.constant 0 : index
    %3 = vector.load %arg5[%c0_3, %c0_4] : memref<1x32xf32, #tpu.memory_space<vmem>>, vector<1x32xf32>
    %4 = vector.broadcast %3 : vector<1x32xf32> to vector<16x32xf32>
    %5 = arith.addf %2, %4 : vector<16x32xf32>
    %c0_5 = arith.constant 0 : index
    %c0_6 = arith.constant 0 : index
    %6 = vector.load %arg2[%c0_5, %c0_6] : memref<16x32xbf16, #tpu.memory_space<vmem>>, vector<16x32xbf16>
    %c0_7 = arith.constant 0 : index
    %c0_8 = arith.constant 0 : index
    %7 = vector.load %arg6[%c0_7, %c0_8] : memref<32x32xbf16, #tpu.memory_space<vmem>>, vector<32x32xbf16>
    %cst_9 = arith.constant dense<0.000000e+00> : vector<16x32xf32>
    %8 = tpu.matmul %6, %7, %cst_9 {dimension_numbers = #tpu.dot_dimension_numbers<[1], [0], [0], [1], [0, 0, 1, 1], [], []>} : vector<16x32xbf16>, vector<32x32xbf16>, vector<16x32xf32> -> vector<16x32xf32>
    %c0_10 = arith.constant 0 : index
    %c0_11 = arith.constant 0 : index
    %9 = vector.load %arg7[%c0_10, %c0_11] : memref<1x32xf32, #tpu.memory_space<vmem>>, vector<1x32xf32>
    %10 = vector.broadcast %9 : vector<1x32xf32> to vector<16x32xf32>
    %11 = arith.addf %8, %10 : vector<16x32xf32>
    %c0_12 = arith.constant 0 : index
    %c0_13 = arith.constant 0 : index
    %12 = vector.load %arg3[%c0_12, %c0_13] : memref<16x32xbf16, #tpu.memory_space<vmem>>, vector<16x32xbf16>
    %c0_14 = arith.constant 0 : index
    %c0_15 = arith.constant 0 : index
    %13 = vector.load %arg8[%c0_14, %c0_15] : memref<32x32xbf16, #tpu.memory_space<vmem>>, vector<32x32xbf16>
    %cst_16 = arith.constant dense<0.000000e+00> : vector<16x32xf32>
    %14 = tpu.matmul %12, %13, %cst_16 {dimension_numbers = #tpu.dot_dimension_numbers<[1], [0], [0], [1], [0, 0, 1, 1], [], []>} : vector<16x32xbf16>, vector<32x32xbf16>, vector<16x32xf32> -> vector<16x32xf32>
    %c0_17 = arith.constant 0 : index
    %c0_18 = arith.constant 0 : index
    %15 = vector.load %arg9[%c0_17, %c0_18] : memref<1x32xf32, #tpu.memory_space<vmem>>, vector<1x32xf32>
    %16 = vector.broadcast %15 : vector<1x32xf32> to vector<16x32xf32>
    %17 = arith.addf %14, %16 : vector<16x32xf32>
    %18 = arith.truncf %5 : vector<16x32xf32> to vector<16x32xbf16>
    %19 = vector.shape_cast %18 : vector<16x32xbf16> to vector<2x8x32xbf16>
    %20 = arith.truncf %11 : vector<16x32xf32> to vector<16x32xbf16>
    %21 = vector.shape_cast %20 : vector<16x32xbf16> to vector<2x8x32xbf16>
    %22 = arith.truncf %17 : vector<16x32xf32> to vector<16x32xbf16>
    %23 = vector.shape_cast %22 : vector<16x32xbf16> to vector<2x8x32xbf16>
    %24 = vector.extract_strided_slice %19 {offsets = [0, 0, 0], sizes = [2, 8, 8], strides = [1, 1, 1]} : vector<2x8x32xbf16> to vector<2x8x8xbf16>
    %25 = vector.extract_strided_slice %21 {offsets = [0, 0, 0], sizes = [2, 8, 8], strides = [1, 1, 1]} : vector<2x8x32xbf16> to vector<2x8x8xbf16>
    %26 = vector.extract_strided_slice %23 {offsets = [0, 0, 0], sizes = [2, 8, 8], strides = [1, 1, 1]} : vector<2x8x32xbf16> to vector<2x8x8xbf16>
    "tpu.trace_start"() <{level = 10 : i32, message = "bqd,bkd->bqk"}> : () -> ()
    %cst_19 = arith.constant dense<0.000000e+00> : vector<2x8x8xf32>
    %27 = tpu.matmul %24, %25, %cst_19 {dimension_numbers = #tpu.dot_dimension_numbers<[2], [2], [1], [1], [0, 0, 0, 1, 1, 1], [0], [0]>} : vector<2x8x8xbf16>, vector<2x8x8xbf16>, vector<2x8x8xf32> -> vector<2x8x8xf32>
    "tpu.trace_stop"() : () -> ()
    %cst_20 = arith.constant 0.353553385 : f32
    %28 = vector.broadcast %cst_20 : f32 to vector<2x8x8xf32>
    %29 = arith.mulf %27, %28 : vector<2x8x8xf32>
    %cst_21 = arith.constant dense<0xFF800000> : vector<2x8xf32>
    %30 = vector.multi_reduction <maximumf>, %29, %cst_21 [2] : vector<2x8x8xf32> to vector<2x8xf32>
    %31 = vector.shape_cast %30 : vector<2x8xf32> to vector<2x8x1xf32>
    %32 = vector.broadcast %31 : vector<2x8x1xf32> to vector<2x8x8xf32>
    %33 = arith.subf %29, %32 : vector<2x8x8xf32>
    %34 = math.exp %33 : vector<2x8x8xf32>
    %cst_22 = arith.constant dense<0.000000e+00> : vector<2x8xf32>
    %35 = vector.multi_reduction <add>, %34, %cst_22 [2] : vector<2x8x8xf32> to vector<2x8xf32>
    %36 = vector.shape_cast %35 : vector<2x8xf32> to vector<2x8x1xf32>
    %37 = tpu.reciprocal %36 {approx = true} : vector<2x8x1xf32> -> vector<2x8x1xf32>
    %38 = vector.broadcast %37 : vector<2x8x1xf32> to vector<2x8x8xf32>
    %39 = arith.mulf %34, %38 : vector<2x8x8xf32>
    %40 = arith.truncf %39 : vector<2x8x8xf32> to vector<2x8x8xbf16>
    "tpu.trace_start"() <{level = 10 : i32, message = "bqk,bkd->bqd"}> : () -> ()
    %cst_23 = arith.constant dense<0.000000e+00> : vector<2x8x8xf32>
    %41 = tpu.matmul %40, %26, %cst_23 {dimension_numbers = #tpu.dot_dimension_numbers<[2], [1], [1], [2], [0, 0, 0, 1, 1, 2], [0], [0]>} : vector<2x8x8xbf16>, vector<2x8x8xbf16>, vector<2x8x8xf32> -> vector<2x8x8xf32>
    "tpu.trace_stop"() : () -> ()
    %42 = vector.shape_cast %41 : vector<2x8x8xf32> to vector<16x8xf32>
    %c0_24 = arith.constant 0 : index
    %c0_25 = arith.constant 0 : index
    %43 = vector.load %arg15[%c0_24, %c0_25] : memref<16x32xf32, #tpu.memory_space<vmem>>, vector<16x8xf32>
    tpu.vector_store %arg15[%c0_24, %c0_25], %42 {strides = array<i32>} : memref<16x32xf32, #tpu.memory_space<vmem>>, vector<16x8xf32>,
    %44 = vector.extract_strided_slice %19 {offsets = [0, 0, 8], sizes = [2, 8, 8], strides = [1, 1, 1]} : vector<2x8x32xbf16> to vector<2x8x8xbf16>
    %45 = vector.extract_strided_slice %21 {offsets = [0, 0, 8], sizes = [2, 8, 8], strides = [1, 1, 1]} : vector<2x8x32xbf16> to vector<2x8x8xbf16>
    %46 = vector.extract_strided_slice %23 {offsets = [0, 0, 8], sizes = [2, 8, 8], strides = [1, 1, 1]} : vector<2x8x32xbf16> to vector<2x8x8xbf16>
    "tpu.trace_start"() <{level = 10 : i32, message = "bqd,bkd->bqk"}> : () -> ()
    %cst_26 = arith.constant dense<0.000000e+00> : vector<2x8x8xf32>
    %47 = tpu.matmul %44, %45, %cst_26 {dimension_numbers = #tpu.dot_dimension_numbers<[2], [2], [1], [1], [0, 0, 0, 1, 1, 1], [0], [0]>} : vector<2x8x8xbf16>, vector<2x8x8xbf16>, vector<2x8x8xf32> -> vector<2x8x8xf32>
    "tpu.trace_stop"() : () -> ()
    %cst_27 = arith.constant 0.353553385 : f32
    %48 = vector.broadcast %cst_27 : f32 to vector<2x8x8xf32>
    %49 = arith.mulf %47, %48 : vector<2x8x8xf32>
    %cst_28 = arith.constant dense<0xFF800000> : vector<2x8xf32>
    %50 = vector.multi_reduction <maximumf>, %49, %cst_28 [2] : vector<2x8x8xf32> to vector<2x8xf32>
    %51 = vector.shape_cast %50 : vector<2x8xf32> to vector<2x8x1xf32>
    %52 = vector.broadcast %51 : vector<2x8x1xf32> to vector<2x8x8xf32>
    %53 = arith.subf %49, %52 : vector<2x8x8xf32>
    %54 = math.exp %53 : vector<2x8x8xf32>
    %cst_29 = arith.constant dense<0.000000e+00> : vector<2x8xf32>
    %55 = vector.multi_reduction <add>, %54, %cst_29 [2] : vector<2x8x8xf32> to vector<2x8xf32>
    %56 = vector.shape_cast %55 : vector<2x8xf32> to vector<2x8x1xf32>
    %57 = tpu.reciprocal %56 {approx = true} : vector<2x8x1xf32> -> vector<2x8x1xf32>
    %58 = vector.broadcast %57 : vector<2x8x1xf32> to vector<2x8x8xf32>
    %59 = arith.mulf %54, %58 : vector<2x8x8xf32>
    %60 = arith.truncf %59 : vector<2x8x8xf32> to vector<2x8x8xbf16>
    "tpu.trace_start"() <{level = 10 : i32, message = "bqk,bkd->bqd"}> : () -> ()
    %cst_30 = arith.constant dense<0.000000e+00> : vector<2x8x8xf32>
    %61 = tpu.matmul %60, %46, %cst_30 {dimension_numbers = #tpu.dot_dimension_numbers<[2], [1], [1], [2], [0, 0, 0, 1, 1, 2], [0], [0]>} : vector<2x8x8xbf16>, vector<2x8x8xbf16>, vector<2x8x8xf32> -> vector<2x8x8xf32>
    "tpu.trace_stop"() : () -> ()
    %62 = vector.shape_cast %61 : vector<2x8x8xf32> to vector<16x8xf32>
    %c0_31 = arith.constant 0 : index
    %c8 = arith.constant 8 : index
    %63 = vector.load %arg15[%c0_31, %c8] : memref<16x32xf32, #tpu.memory_space<vmem>>, vector<16x8xf32>
    tpu.vector_store %arg15[%c0_31, %c8], %62 {strides = array<i32>} : memref<16x32xf32, #tpu.memory_space<vmem>>, vector<16x8xf32>,
    %64 = vector.extract_strided_slice %19 {offsets = [0, 0, 16], sizes = [2, 8, 8], strides = [1, 1, 1]} : vector<2x8x32xbf16> to vector<2x8x8xbf16>
    %65 = vector.extract_strided_slice %21 {offsets = [0, 0, 16], sizes = [2, 8, 8], strides = [1, 1, 1]} : vector<2x8x32xbf16> to vector<2x8x8xbf16>
    %66 = vector.extract_strided_slice %23 {offsets = [0, 0, 16], sizes = [2, 8, 8], strides = [1, 1, 1]} : vector<2x8x32xbf16> to vector<2x8x8xbf16>
    "tpu.trace_start"() <{level = 10 : i32, message = "bqd,bkd->bqk"}> : () -> ()
    %cst_32 = arith.constant dense<0.000000e+00> : vector<2x8x8xf32>
    %67 = tpu.matmul %64, %65, %cst_32 {dimension_numbers = #tpu.dot_dimension_numbers<[2], [2], [1], [1], [0, 0, 0, 1, 1, 1], [0], [0]>} : vector<2x8x8xbf16>, vector<2x8x8xbf16>, vector<2x8x8xf32> -> vector<2x8x8xf32>
    "tpu.trace_stop"() : () -> ()
    %cst_33 = arith.constant 0.353553385 : f32
    %68 = vector.broadcast %cst_33 : f32 to vector<2x8x8xf32>
    %69 = arith.mulf %67, %68 : vector<2x8x8xf32>
    %cst_34 = arith.constant dense<0xFF800000> : vector<2x8xf32>
    %70 = vector.multi_reduction <maximumf>, %69, %cst_34 [2] : vector<2x8x8xf32> to vector<2x8xf32>
    %71 = vector.shape_cast %70 : vector<2x8xf32> to vector<2x8x1xf32>
    %72 = vector.broadcast %71 : vector<2x8x1xf32> to vector<2x8x8xf32>
    %73 = arith.subf %69, %72 : vector<2x8x8xf32>
    %74 = math.exp %73 : vector<2x8x8xf32>
    %cst_35 = arith.constant dense<0.000000e+00> : vector<2x8xf32>
    %75 = vector.multi_reduction <add>, %74, %cst_35 [2] : vector<2x8x8xf32> to vector<2x8xf32>
    %76 = vector.shape_cast %75 : vector<2x8xf32> to vector<2x8x1xf32>
    %77 = tpu.reciprocal %76 {approx = true} : vector<2x8x1xf32> -> vector<2x8x1xf32>
    %78 = vector.broadcast %77 : vector<2x8x1xf32> to vector<2x8x8xf32>
    %79 = arith.mulf %74, %78 : vector<2x8x8xf32>
    %80 = arith.truncf %79 : vector<2x8x8xf32> to vector<2x8x8xbf16>
    "tpu.trace_start"() <{level = 10 : i32, message = "bqk,bkd->bqd"}> : () -> ()
    %cst_36 = arith.constant dense<0.000000e+00> : vector<2x8x8xf32>
    %81 = tpu.matmul %80, %66, %cst_36 {dimension_numbers = #tpu.dot_dimension_numbers<[2], [1], [1], [2], [0, 0, 0, 1, 1, 2], [0], [0]>} : vector<2x8x8xbf16>, vector<2x8x8xbf16>, vector<2x8x8xf32> -> vector<2x8x8xf32>
    "tpu.trace_stop"() : () -> ()
    %82 = vector.shape_cast %81 : vector<2x8x8xf32> to vector<16x8xf32>
    %c0_37 = arith.constant 0 : index
    %c16 = arith.constant 16 : index
    %83 = vector.load %arg15[%c0_37, %c16] : memref<16x32xf32, #tpu.memory_space<vmem>>, vector<16x8xf32>
    tpu.vector_store %arg15[%c0_37, %c16], %82 {strides = array<i32>} : memref<16x32xf32, #tpu.memory_space<vmem>>, vector<16x8xf32>,
    %84 = vector.extract_strided_slice %19 {offsets = [0, 0, 24], sizes = [2, 8, 8], strides = [1, 1, 1]} : vector<2x8x32xbf16> to vector<2x8x8xbf16>
    %85 = vector.extract_strided_slice %21 {offsets = [0, 0, 24], sizes = [2, 8, 8], strides = [1, 1, 1]} : vector<2x8x32xbf16> to vector<2x8x8xbf16>
    %86 = vector.extract_strided_slice %23 {offsets = [0, 0, 24], sizes = [2, 8, 8], strides = [1, 1, 1]} : vector<2x8x32xbf16> to vector<2x8x8xbf16>
    "tpu.trace_start"() <{level = 10 : i32, message = "bqd,bkd->bqk"}> : () -> ()
    %cst_38 = arith.constant dense<0.000000e+00> : vector<2x8x8xf32>
    %87 = tpu.matmul %84, %85, %cst_38 {dimension_numbers = #tpu.dot_dimension_numbers<[2], [2], [1], [1], [0, 0, 0, 1, 1, 1], [0], [0]>} : vector<2x8x8xbf16>, vector<2x8x8xbf16>, vector<2x8x8xf32> -> vector<2x8x8xf32>
    "tpu.trace_stop"() : () -> ()
    %cst_39 = arith.constant 0.353553385 : f32
    %88 = vector.broadcast %cst_39 : f32 to vector<2x8x8xf32>
    %89 = arith.mulf %87, %88 : vector<2x8x8xf32>
    %cst_40 = arith.constant dense<0xFF800000> : vector<2x8xf32>
    %90 = vector.multi_reduction <maximumf>, %89, %cst_40 [2] : vector<2x8x8xf32> to vector<2x8xf32>
    %91 = vector.shape_cast %90 : vector<2x8xf32> to vector<2x8x1xf32>
    %92 = vector.broadcast %91 : vector<2x8x1xf32> to vector<2x8x8xf32>
    %93 = arith.subf %89, %92 : vector<2x8x8xf32>
    %94 = math.exp %93 : vector<2x8x8xf32>
    %cst_41 = arith.constant dense<0.000000e+00> : vector<2x8xf32>
    %95 = vector.multi_reduction <add>, %94, %cst_41 [2] : vector<2x8x8xf32> to vector<2x8xf32>
    %96 = vector.shape_cast %95 : vector<2x8xf32> to vector<2x8x1xf32>
    %97 = tpu.reciprocal %96 {approx = true} : vector<2x8x1xf32> -> vector<2x8x1xf32>
    %98 = vector.broadcast %97 : vector<2x8x1xf32> to vector<2x8x8xf32>
    %99 = arith.mulf %94, %98 : vector<2x8x8xf32>
    %100 = arith.truncf %99 : vector<2x8x8xf32> to vector<2x8x8xbf16>
    "tpu.trace_start"() <{level = 10 : i32, message = "bqk,bkd->bqd"}> : () -> ()
    %cst_42 = arith.constant dense<0.000000e+00> : vector<2x8x8xf32>
    %101 = tpu.matmul %100, %86, %cst_42 {dimension_numbers = #tpu.dot_dimension_numbers<[2], [1], [1], [2], [0, 0, 0, 1, 1, 2], [0], [0]>} : vector<2x8x8xbf16>, vector<2x8x8xbf16>, vector<2x8x8xf32> -> vector<2x8x8xf32>
    "tpu.trace_stop"() : () -> ()
    %102 = vector.shape_cast %101 : vector<2x8x8xf32> to vector<16x8xf32>
    %c0_43 = arith.constant 0 : index
    %c24 = arith.constant 24 : index
    %103 = vector.load %arg15[%c0_43, %c24] : memref<16x32xf32, #tpu.memory_space<vmem>>, vector<16x8xf32>
    tpu.vector_store %arg15[%c0_43, %c24], %102 {strides = array<i32>} : memref<16x32xf32, #tpu.memory_space<vmem>>, vector<16x8xf32>,
    %c0_44 = arith.constant 0 : index
    %c0_45 = arith.constant 0 : index
    %104 = vector.load %arg15[%c0_44, %c0_45] : memref<16x32xf32, #tpu.memory_space<vmem>>, vector<16x32xf32>
    %105 = arith.truncf %104 : vector<16x32xf32> to vector<16x32xbf16>
    %c0_46 = arith.constant 0 : index
    %c0_47 = arith.constant 0 : index
    %106 = vector.load %arg10[%c0_46, %c0_47] : memref<32x32xbf16, #tpu.memory_space<vmem>>, vector<32x32xbf16>
    %cst_48 = arith.constant dense<0.000000e+00> : vector<16x32xf32>
    %107 = tpu.matmul %105, %106, %cst_48 {dimension_numbers = #tpu.dot_dimension_numbers<[1], [0], [0], [1], [0, 0, 1, 1], [], []>} : vector<16x32xbf16>, vector<32x32xbf16>, vector<16x32xf32> -> vector<16x32xf32>
    %c0_49 = arith.constant 0 : index
    %c0_50 = arith.constant 0 : index
    %108 = vector.load %arg11[%c0_49, %c0_50] : memref<1x32xf32, #tpu.memory_space<vmem>>, vector<1x32xf32>
    %109 = vector.broadcast %108 : vector<1x32xf32> to vector<16x32xf32>
    %110 = arith.addf %107, %109 : vector<16x32xf32>
    %cst_51 = arith.constant dense<0.000000e+00> : vector<16xf32>
    %111 = vector.multi_reduction <add>, %110, %cst_51 [1] : vector<16x32xf32> to vector<16xf32>
    %112 = vector.shape_cast %111 : vector<16xf32> to vector<16x1xf32>
    %cst_52 = arith.constant 3.200000e+01 : f32
    %113 = vector.broadcast %cst_52 : f32 to vector<16x1xf32>
    %114 = arith.divf %112, %113 : vector<16x1xf32>
    %115 = arith.mulf %110, %110 : vector<16x32xf32>
    %cst_53 = arith.constant dense<0.000000e+00> : vector<16xf32>
    %116 = vector.multi_reduction <add>, %115, %cst_53 [1] : vector<16x32xf32> to vector<16xf32>
    %117 = vector.shape_cast %116 : vector<16xf32> to vector<16x1xf32>
    %cst_54 = arith.constant 3.200000e+01 : f32
    %118 = vector.broadcast %cst_54 : f32 to vector<16x1xf32>
    %119 = arith.divf %117, %118 : vector<16x1xf32>
    %120 = arith.mulf %114, %114 : vector<16x1xf32>
    %121 = arith.subf %119, %120 : vector<16x1xf32>
    %cst_55 = arith.constant 0.000000e+00 : f32
    %122 = vector.broadcast %cst_55 : f32 to vector<16x1xf32>
    %123 = arith.maximumf %121, %122 : vector<16x1xf32>
    %124 = vector.broadcast %114 : vector<16x1xf32> to vector<16x32xf32>
    %125 = arith.subf %110, %124 : vector<16x32xf32>
    %cst_56 = arith.constant 9.99999974E-6 : f32
    %126 = vector.broadcast %cst_56 : f32 to vector<16x1xf32>
    %127 = arith.addf %123, %126 : vector<16x1xf32>
    %128 = math.rsqrt %127 : vector<16x1xf32>
    %129 = vector.broadcast %128 : vector<16x1xf32> to vector<16x32xf32>
    %130 = arith.mulf %125, %129 : vector<16x32xf32>
    %c0_57 = arith.constant 0 : index
    %c0_58 = arith.constant 0 : index
    %131 = vector.load %arg12[%c0_57, %c0_58] : memref<1x32xf32, #tpu.memory_space<vmem>>, vector<1x32xf32>
    %132 = vector.broadcast %131 : vector<1x32xf32> to vector<16x32xf32>
    %133 = arith.mulf %130, %132 : vector<16x32xf32>
    %c0_59 = arith.constant 0 : index
    %c0_60 = arith.constant 0 : index
    %134 = vector.load %arg13[%c0_59, %c0_60] : memref<1x32xf32, #tpu.memory_space<vmem>>, vector<1x32xf32>
    %135 = vector.broadcast %134 : vector<1x32xf32> to vector<16x32xf32>
    %136 = arith.addf %133, %135 : vector<16x32xf32>
    %c0_61 = arith.constant 0 : index
    %c0_62 = arith.constant 0 : index
    %137 = vector.load %arg14[%c0_61, %c0_62] : memref<16x32xf32, #tpu.memory_space<vmem>>, vector<16x32xf32>
    tpu.vector_store %arg14[%c0_61, %c0_62], %136 {strides = array<i32>} : memref<16x32xf32, #tpu.memory_space<vmem>>, vector<16x32xf32>,
    return
  }
  func.func @transform_0(%arg0: i32) -> (i32, i32) {
    %c0_i32 = arith.constant 0 : i32
    %c0_i32_0 = arith.constant 0 : i32
    return %arg0, %c0_i32 : i32, i32
  }
  func.func @transform_1(%arg0: i32) -> (i32, i32) {
    %c0_i32 = arith.constant 0 : i32
    %c0_i32_0 = arith.constant 0 : i32
    return %arg0, %c0_i32 : i32, i32
  }
  func.func @transform_2(%arg0: i32) -> (i32, i32) {
    %c0_i32 = arith.constant 0 : i32
    %c0_i32_0 = arith.constant 0 : i32
    return %arg0, %c0_i32 : i32, i32
  }
  func.func @transform_3(%arg0: i32) -> (i32, i32) {
    %c0_i32 = arith.constant 0 : i32
    %c0_i32_0 = arith.constant 0 : i32
    %c0_i32_1 = arith.constant 0 : i32
    return %c0_i32, %c0_i32_0 : i32, i32
  }
  func.func @transform_4(%arg0: i32) -> (i32, i32) {
    %c0_i32 = arith.constant 0 : i32
    %c0_i32_0 = arith.constant 0 : i32
    %c0_i32_1 = arith.constant 0 : i32
    return %c0_i32, %c0_i32_0 : i32, i32
  }
  func.func @transform_5(%arg0: i32) -> (i32, i32) {
    %c0_i32 = arith.constant 0 : i32
    %c0_i32_0 = arith.constant 0 : i32
    %c0_i32_1 = arith.constant 0 : i32
    return %c0_i32, %c0_i32_0 : i32, i32
  }
  func.func @transform_6(%arg0: i32) -> (i32, i32) {
    %c0_i32 = arith.constant 0 : i32
    %c0_i32_0 = arith.constant 0 : i32
    %c0_i32_1 = arith.constant 0 : i32
    return %c0_i32, %c0_i32_0 : i32, i32
  }
  func.func @transform_7(%arg0: i32) -> (i32, i32) {
    %c0_i32 = arith.constant 0 : i32
    %c0_i32_0 = arith.constant 0 : i32
    %c0_i32_1 = arith.constant 0 : i32
    return %c0_i32, %c0_i32_0 : i32, i32
  }
  func.func @transform_8(%arg0: i32) -> (i32, i32) {
    %c0_i32 = arith.constant 0 : i32
    %c0_i32_0 = arith.constant 0 : i32
    %c0_i32_1 = arith.constant 0 : i32
    return %c0_i32, %c0_i32_0 : i32, i32
  }
  func.func @transform_9(%arg0: i32) -> (i32, i32) {
    %c0_i32 = arith.constant 0 : i32
    %c0_i32_0 = arith.constant 0 : i32
    %c0_i32_1 = arith.constant 0 : i32
    return %c0_i32, %c0_i32_0 : i32, i32
  }
  func.func @transform_10(%arg0: i32) -> (i32, i32) {
    %c0_i32 = arith.constant 0 : i32
    %c0_i32_0 = arith.constant 0 : i32
    %c0_i32_1 = arith.constant 0 : i32
    return %c0_i32, %c0_i32_0 : i32, i32
  }
  func.func @transform_11(%arg0: i32) -> (i32, i32) {
    %c0_i32 = arith.constant 0 : i32
    %c0_i32_0 = arith.constant 0 : i32
    %c0_i32_1 = arith.constant 0 : i32
    return %c0_i32, %c0_i32_0 : i32, i32
  }
  func.func @transform_12(%arg0: i32) -> (i32, i32) {
    %c0_i32 = arith.constant 0 : i32
    %c0_i32_0 = arith.constant 0 : i32
    %c0_i32_1 = arith.constant 0 : i32
    return %c0_i32, %c0_i32_0 : i32, i32
  }
  func.func @transform_13(%arg0: i32) -> (i32, i32) {
    %c0_i32 = arith.constant 0 : i32
    %c0_i32_0 = arith.constant 0 : i32
    return %arg0, %c0_i32 : i32, i32
  }
}

</mosaic_0001>

<llo_original>
// kernel: multi_view_cross_attention.1
$region0: #{multi_view_cross_attention.1}
  #allocation0 [shape = 'u32[]', space=smem, size = 0x4, offset = 0x4, fixed_abs, tag = 'smem constant byte address 0x4 - core index']
  #allocation1 [shape = 'u32[144,128]{1,0:T(1,128)}', space=vmem, size = 0x12000, scoped, tag = 'internal scratch']
  #allocation2 [shape = 'f32[16,32]{1,0:T(8,128)}', space=vmem, size = 0x2000, scoped, tag = 'scratch operand']
  %s0 = inlined_call_operand.vmem [shape: bf16[16,32], index: 0, kind: input, shape index: {}]
  %s1 = inlined_call_operand.vmem [shape: bf16[16,32], index: 1, kind: input, shape index: {}]
  %s2 = inlined_call_operand.vmem [shape: bf16[16,32], index: 2, kind: input, shape index: {}]
  %s3 = inlined_call_operand.vmem [shape: bf16[32,32], index: 3, kind: input, shape index: {}]
  %s4 = inlined_call_operand.vmem [shape: f32[1,32], index: 4, kind: input, shape index: {}]
  %s5 = inlined_call_operand.vmem [shape: bf16[32,32], index: 5, kind: input, shape index: {}]
  %s6 = inlined_call_operand.vmem [shape: f32[1,32], index: 6, kind: input, shape index: {}]
  %s7 = inlined_call_operand.vmem [shape: bf16[32,32], index: 7, kind: input, shape index: {}]
  %s8 = inlined_call_operand.vmem [shape: f32[1,32], index: 8, kind: input, shape index: {}]
  %s9 = inlined_call_operand.vmem [shape: bf16[32,32], index: 9, kind: input, shape index: {}]
  %s10 = inlined_call_operand.vmem [shape: f32[1,32], index: 10, kind: input, shape index: {}]
  %s11 = inlined_call_operand.vmem [shape: f32[1,32], index: 11, kind: input, shape index: {}]
  %s12 = inlined_call_operand.vmem [shape: f32[1,32], index: 12, kind: input, shape index: {}]
  %s13 = inlined_call_operand.hbm [shape: f32[16,32], index: 13, kind: output, shape index: {}]
  %s14 = sld [smem:[#allocation0]]
  $region62: #{multi_view_cross_attention.1} parent=0
    _
  %s16 = ssub.s32 1, %s14
  %s17 = scalar_select 0, %s16, %s14
  $region1: #{multi_view_cross_attention.1} parent=0
    #allocation3 [shape = 'u8[8192]{0}', space=vmem, size = 0x2000, scoped, tag = 'output window, operand 0, single buffered']
    #allocation4 [shape = 's32[1]{0}', space=sflag, size = 0x4, scoped, tag = 'scoped memory for multi_view_cross_attention.1']
    %18 = vsyncpa [#allocation4], 0
    // Predicated region
    $region2: #{multi_view_cross_attention.1} parent=1 // pred_check
      _
    $region3: #{multi_view_cross_attention.1} parent=1 // pred_check_branch
      %20 = sbr.rel (0) target = $region5
    $region4: #{multi_view_cross_attention.1} parent=1 // pred_region
      _
    $region5: #{multi_view_cross_attention.1} parent=1 // pred_fallthru
      _
    // Predicated region
    $region6: #{multi_view_cross_attention.1} parent=1 // pred_check
      _
    $region7: #{multi_view_cross_attention.1} parent=1 // pred_check_branch
      %22 = sbr.rel (0) target = $region9
    $region8: #{multi_view_cross_attention.1} parent=1 // pred_region
      _
    $region9: #{multi_view_cross_attention.1} parent=1 // pred_fallthru
      _
    // Predicated region
    $region10: #{multi_view_cross_attention.1} parent=1 // pred_check
      _
    $region11: #{multi_view_cross_attention.1} parent=1 // pred_check_branch
      %24 = sbr.rel (0) target = $region13
    $region12: #{multi_view_cross_attention.1} parent=1 // pred_region
      _
    $region13: #{multi_view_cross_attention.1} parent=1 // pred_fallthru
      _
    // Predicated region
    $region14: #{multi_view_cross_attention.1} parent=1 // pred_check
      _
    $region15: #{multi_view_cross_attention.1} parent=1 // pred_check_branch
      %26 = sbr.rel (0) target = $region17
    $region16: #{multi_view_cross_attention.1} parent=1 // pred_region
      _
    $region17: #{multi_view_cross_attention.1} parent=1 // pred_fallthru
      _
    // Predicated region
    $region18: #{multi_view_cross_attention.1} parent=1 // pred_check
      _
    $region19: #{multi_view_cross_attention.1} parent=1 // pred_check_branch
      %28 = sbr.rel (0) target = $region21
    $region20: #{multi_view_cross_attention.1} parent=1 // pred_region
      _
    $region21: #{multi_view_cross_attention.1} parent=1 // pred_fallthru
      _
    // Predicated region
    $region22: #{multi_view_cross_attention.1} parent=1 // pred_check
      _
    $region23: #{multi_view_cross_attention.1} parent=1 // pred_check_branch
      %30 = sbr.rel (0) target = $region25
    $region24: #{multi_view_cross_attention.1} parent=1 // pred_region
      _
    $region25: #{multi_view_cross_attention.1} parent=1 // pred_fallthru
      _
    // Predicated region
    $region26: #{multi_view_cross_attention.1} parent=1 // pred_check
      _
    $region27: #{multi_view_cross_attention.1} parent=1 // pred_check_branch
      %32 = sbr.rel (0) target = $region29
    $region28: #{multi_view_cross_attention.1} parent=1 // pred_region
      _
    $region29: #{multi_view_cross_attention.1} parent=1 // pred_fallthru
      _
    // Predicated region
    $region30: #{multi_view_cross_attention.1} parent=1 // pred_check
      _
    $region31: #{multi_view_cross_attention.1} parent=1 // pred_check_branch
      %34 = sbr.rel (0) target = $region33
    $region32: #{multi_view_cross_attention.1} parent=1 // pred_region
      _
    $region33: #{multi_view_cross_attention.1} parent=1 // pred_fallthru
      _
    // Predicated region
    $region34: #{multi_view_cross_attention.1} parent=1 // pred_check
      _
    $region35: #{multi_view_cross_attention.1} parent=1 // pred_check_branch
      %36 = sbr.rel (0) target = $region37
    $region36: #{multi_view_cross_attention.1} parent=1 // pred_region
      _
    $region37: #{multi_view_cross_attention.1} parent=1 // pred_fallthru
      _
    // Predicated region
    $region38: #{multi_view_cross_attention.1} parent=1 // pred_check
      _
    $region39: #{multi_view_cross_attention.1} parent=1 // pred_check_branch
      %38 = sbr.rel (0) target = $region41
    $region40: #{multi_view_cross_attention.1} parent=1 // pred_region
      _
    $region41: #{multi_view_cross_attention.1} parent=1 // pred_fallthru
      _
    // Predicated region
    $region42: #{multi_view_cross_attention.1} parent=1 // pred_check
      _
    $region43: #{multi_view_cross_attention.1} parent=1 // pred_check_branch
      %40 = sbr.rel (0) target = $region45
    $region44: #{multi_view_cross_attention.1} parent=1 // pred_region
      _
    $region45: #{multi_view_cross_attention.1} parent=1 // pred_fallthru
      _
    // Predicated region
    $region46: #{multi_view_cross_attention.1} parent=1 // pred_check
      _
    $region47: #{multi_view_cross_attention.1} parent=1 // pred_check_branch
      %42 = sbr.rel (0) target = $region49
    $region48: #{multi_view_cross_attention.1} parent=1 // pred_region
      _
    $region49: #{multi_view_cross_attention.1} parent=1 // pred_fallthru
      _
    // Predicated region
    $region50: #{multi_view_cross_attention.1} parent=1 // pred_check
      _
    $region51: #{multi_view_cross_attention.1} parent=1 // pred_check_branch
      %44 = sbr.rel (0) target = $region53
    $region52: #{multi_view_cross_attention.1} parent=1 // pred_region
      _
    $region53: #{multi_view_cross_attention.1} parent=1 // pred_fallthru
      _
    %v46 = vld [vmem:[%s0] sm:$0xf]
    %v47 = vld [vmem:[%s0 + $0x4] sm:$0xf]
    %v48 = vld [vmem:[%s3] sm:$0xf]
    %v49 = vld [vmem:[%s3 + $0x4] sm:$0xf]
    %v50 = vld [vmem:[%s3 + $0x8] sm:$0xf]
    %v51 = vld [vmem:[%s3 + $0xc] sm:$0xf]
    %v52 = vld [vmem:[%s4] sm:$0x1]
    %v54 = vlaneseq
    %v55 = vshrl.u32 %v54, 7
    %v56 = vsub.s32 0, %v55
    %v57 = vrot.slane %v52, %v56
    %v61 = vunpack.c.l.b16 %v46
    %v62 = vunpack.c.l.b16 %v47
    %v63 = vpack.c.b16 %v62, %v61
    %v68 = vunpack.c.l.b16 %v48
    %v69 = vunpack.c.l.b16 %v49
    %v70 = vunpack.c.l.b16 %v50
    %v71 = vunpack.c.l.b16 %v51
    %v72 = vpack.c.b16 %v69, %v68
    %v73 = vpack.c.b16 %v71, %v70
    %vm76 = vcmask 261120
    %v78 = vsel %vm76, %v63, 0
    %80 = vmatprep.subr.bf16.mxu0 0
    %81 = vmatpush1.bf16.msra.mxu0 0
    %82 = vmatprep.subr.bf16.mxu0 0
    %83 = vmatpush1.bf16.msra.mxu0 0
    %84 = vmatprep.subr.bf16.mxu0 0
    %85 = vmatpush1.bf16.msra.mxu0 0
    %86 = vmatprep.subr.bf16.mxu0 0
    %87 = vmatpush1.bf16.msra.mxu0 0
    %88 = vmatprep.subr.bf16.mxu0 0
    %89 = vmatpush1.bf16.msra.mxu0 0
    %90 = vmatprep.subr.bf16.mxu0 0
    %91 = vmatpush1.bf16.msra.mxu0 0
    %92 = vmatprep.subr.bf16.mxu0 0
    %93 = vmatpush1.bf16.msra.mxu0 %v73
    %94 = vmatprep.subr.bf16.mxu0 0
    %95 = vmatpush1.bf16.msra.mxu0 %v72
    %96 = vmatprep.subr.bf16.mxu0 0
    %97 = vmatpush2.bf16.msra.mxu0 0
    %98 = vmatprep.subr.bf16.mxu0 0
    %99 = vmatpush2.bf16.msra.mxu0 0
    %100 = vmatprep.subr.bf16.mxu0 0
    %101 = vmatpush2.bf16.msra.mxu0 0
    %102 = vmatprep.subr.bf16.mxu0 0
    %103 = vmatpush2.bf16.msra.mxu0 0
    %104 = vmatprep.subr.bf16.mxu0 0
    %105 = vmatpush2.bf16.msra.mxu0 0
    %106 = vmatprep.subr.bf16.mxu0 0
    %107 = vmatpush2.bf16.msra.mxu0 0
    %108 = vmatprep.subr.bf16.mxu0 0
    %109 = vmatpush2.bf16.msra.mxu0 0
    %110 = vmatprep.subr.bf16.mxu0 0
    %111 = vmatpush2.bf16.msra.mxu0 0
    %112 = vmatprep.mubr.bf16.mxu0 0
    %113 = vmatmul.mubr.bf16.gmra.mxu0 %v78
    %v114 = vpop.f32.mrf.mxu0
    %v115 = vadd.f32 %v57, %v114
    %v116 = vpop.f32.mrf.mxu0
    %v117 = vpop.f32.mrf.mxu0
    %v118 = vadd.f32 %v57, %v117
    %v119 = vpop.f32.mrf.mxu0
    %120 = vdwg.mxu0
    %v121 = vld [vmem:[%s1] sm:$0xf]
    %v122 = vld [vmem:[%s1 + $0x4] sm:$0xf]
    %v123 = vld [vmem:[%s5] sm:$0xf]
    %v124 = vld [vmem:[%s5 + $0x4] sm:$0xf]
    %v125 = vld [vmem:[%s5 + $0x8] sm:$0xf]
    %v126 = vld [vmem:[%s5 + $0xc] sm:$0xf]
    %v127 = vld [vmem:[%s6] sm:$0x1]
    %v129 = vlaneseq
    %v130 = vshrl.u32 %v129, 7
    %v131 = vsub.s32 0, %v130
    %v132 = vrot.slane %v127, %v131
    %v136 = vunpack.c.l.b16 %v121
    %v137 = vunpack.c.l.b16 %v122
    %v138 = vpack.c.b16 %v137, %v136
    %v143 = vunpack.c.l.b16 %v123
    %v144 = vunpack.c.l.b16 %v124
    %v145 = vunpack.c.l.b16 %v125
    %v146 = vunpack.c.l.b16 %v126
    %v147 = vpack.c.b16 %v144, %v143
    %v148 = vpack.c.b16 %v146, %v145
    %v152 = vsel %vm76, %v138, 0
    %154 = vmatprep.subr.bf16.mxu0 0
    %155 = vmatpush1.bf16.msra.mxu0 0
    %156 = vmatprep.subr.bf16.mxu0 0
    %157 = vmatpush1.bf16.msra.mxu0 0
    %158 = vmatprep.subr.bf16.mxu0 0
    %159 = vmatpush1.bf16.msra.mxu0 0
    %160 = vmatprep.subr.bf16.mxu0 0
    %161 = vmatpush1.bf16.msra.mxu0 0
    %162 = vmatprep.subr.bf16.mxu0 0
    %163 = vmatpush1.bf16.msra.mxu0 0
    %164 = vmatprep.subr.bf16.mxu0 0
    %165 = vmatpush1.bf16.msra.mxu0 0
    %166 = vmatprep.subr.bf16.mxu0 0
    %167 = vmatpush1.bf16.msra.mxu0 %v148
    %168 = vmatprep.subr.bf16.mxu0 0
    %169 = vmatpush1.bf16.msra.mxu0 %v147
    %170 = vmatprep.subr.bf16.mxu0 0
    %171 = vmatpush2.bf16.msra.mxu0 0
    %172 = vmatprep.subr.bf16.mxu0 0
    %173 = vmatpush2.bf16.msra.mxu0 0
    %174 = vmatprep.subr.bf16.mxu0 0
    %175 = vmatpush2.bf16.msra.mxu0 0
    %176 = vmatprep.subr.bf16.mxu0 0
    %177 = vmatpush2.bf16.msra.mxu0 0
    %178 = vmatprep.subr.bf16.mxu0 0
    %179 = vmatpush2.bf16.msra.mxu0 0
    %180 = vmatprep.subr.bf16.mxu0 0
    %181 = vmatpush2.bf16.msra.mxu0 0
    %182 = vmatprep.subr.bf16.mxu0 0
    %183 = vmatpush2.bf16.msra.mxu0 0
    %184 = vmatprep.subr.bf16.mxu0 0
    %185 = vmatpush2.bf16.msra.mxu0 0
    %186 = vmatprep.mubr.bf16.mxu0 0
    %187 = vmatmul.mubr.bf16.gmra.mxu0 %v152
    %v188 = vpop.f32.mrf.mxu0
    %v189 = vadd.f32 %v132, %v188
    %v190 = vpop.f32.mrf.mxu0
    %v191 = vpop.f32.mrf.mxu0
    %v192 = vadd.f32 %v132, %v191
    %v193 = vpop.f32.mrf.mxu0
    %194 = vdwg.mxu0
    %v195 = vld [vmem:[%s2] sm:$0xf]
    %v196 = vld [vmem:[%s2 + $0x4] sm:$0xf]
    %v197 = vld [vmem:[%s7] sm:$0xf]
    %v198 = vld [vmem:[%s7 + $0x4] sm:$0xf]
    %v199 = vld [vmem:[%s7 + $0x8] sm:$0xf]
    %v200 = vld [vmem:[%s7 + $0xc] sm:$0xf]
    %v201 = vld [vmem:[%s8] sm:$0x1]
    %v203 = vlaneseq
    %v204 = vshrl.u32 %v203, 7
    %v205 = vsub.s32 0, %v204
    %v206 = vrot.slane %v201, %v205
    %v210 = vunpack.c.l.b16 %v195
    %v211 = vunpack.c.l.b16 %v196
    %v212 = vpack.c.b16 %v211, %v210
    %v217 = vunpack.c.l.b16 %v197
    %v218 = vunpack.c.l.b16 %v198
    %v219 = vunpack.c.l.b16 %v199
    %v220 = vunpack.c.l.b16 %v200
    %v221 = vpack.c.b16 %v218, %v217
    %v222 = vpack.c.b16 %v220, %v219
    %v226 = vsel %vm76, %v212, 0
    %228 = vmatprep.subr.bf16.mxu0 0
    %229 = vmatpush1.bf16.msra.mxu0 0
    %230 = vmatprep.subr.bf16.mxu0 0
    %231 = vmatpush1.bf16.msra.mxu0 0
    %232 = vmatprep.subr.bf16.mxu0 0
    %233 = vmatpush1.bf16.msra.mxu0 0
    %234 = vmatprep.subr.bf16.mxu0 0
    %235 = vmatpush1.bf16.msra.mxu0 0
    %236 = vmatprep.subr.bf16.mxu0 0
    %237 = vmatpush1.bf16.msra.mxu0 0
    %238 = vmatprep.subr.bf16.mxu0 0
    %239 = vmatpush1.bf16.msra.mxu0 0
    %240 = vmatprep.subr.bf16.mxu0 0
    %241 = vmatpush1.bf16.msra.mxu0 %v222
    %242 = vmatprep.subr.bf16.mxu0 0
    %243 = vmatpush1.bf16.msra.mxu0 %v221
    %244 = vmatprep.subr.bf16.mxu0 0
    %245 = vmatpush2.bf16.msra.mxu0 0
    %246 = vmatprep.subr.bf16.mxu0 0
    %247 = vmatpush2.bf16.msra.mxu0 0
    %248 = vmatprep.subr.bf16.mxu0 0
    %249 = vmatpush2.bf16.msra.mxu0 0
    %250 = vmatprep.subr.bf16.mxu0 0
    %251 = vmatpush2.bf16.msra.mxu0 0
    %252 = vmatprep.subr.bf16.mxu0 0
    %253 = vmatpush2.bf16.msra.mxu0 0
    %254 = vmatprep.subr.bf16.mxu0 0
    %255 = vmatpush2.bf16.msra.mxu0 0
    %256 = vmatprep.subr.bf16.mxu0 0
    %257 = vmatpush2.bf16.msra.mxu0 0
    %258 = vmatprep.subr.bf16.mxu0 0
    %259 = vmatpush2.bf16.msra.mxu0 0
    %260 = vmatprep.mubr.bf16.mxu0 0
    %261 = vmatmul.mubr.bf16.gmra.mxu0 %v226
    %v262 = vpop.f32.mrf.mxu0
    %v263 = vadd.f32 %v206, %v262
    %v264 = vpop.f32.mrf.mxu0
    %v265 = vpop.f32.mrf.mxu0
    %v266 = vadd.f32 %v206, %v265
    %v267 = vpop.f32.mrf.mxu0
    %268 = vdwg.mxu0
    %v269 = vpack.c.bf16 %v118, %v115
    %v271 = vunpack.c.l.b16 %v269
    %v272 = vunpack.c.h.b16 %v269
    %v273 = vpack.c.b16 %v271, %v271
    %v274 = vpack.c.b16 %v272, %v272
    %v275 = vpack.c.bf16 %v192, %v189
    %v277 = vunpack.c.l.b16 %v275
    %v278 = vunpack.c.h.b16 %v275
    %v279 = vpack.c.b16 %v277, %v277
    %v280 = vpack.c.b16 %v278, %v278
    %v281 = vpack.c.bf16 %v266, %v263
    %v283 = vunpack.c.l.b16 %v281
    %v284 = vunpack.c.h.b16 %v281
    %v285 = vpack.c.b16 %v283, %v283
    %v286 = vpack.c.b16 %v284, %v284
    %vm287 = vcmask 64512
    %v289 = vsel %vm287, %v273, 0
    %v292 = vsel %vm287, %v279, 0
    %294 = vmatprep.subr.bf16.mxu0 0
    %295 = vmatpush1.bf16.xpose.msra.mxu0 0
    %296 = vmatprep.subr.bf16.mxu0 0
    %297 = vmatpush1.bf16.xpose.msra.mxu0 0
    %298 = vmatprep.subr.bf16.mxu0 0
    %299 = vmatpush1.bf16.xpose.msra.mxu0 0
    %300 = vmatprep.subr.bf16.mxu0 0
    %301 = vmatpush1.bf16.xpose.msra.mxu0 0
    %302 = vmatprep.subr.bf16.mxu0 0
    %303 = vmatpush1.bf16.xpose.msra.mxu0 0
    %304 = vmatprep.subr.bf16.mxu0 0
    %305 = vmatpush1.bf16.xpose.msra.mxu0 0
    %306 = vmatprep.subr.bf16.mxu0 0
    %307 = vmatpush1.bf16.xpose.msra.mxu0 0
    %308 = vmatprep.subr.bf16.mxu0 0
    %309 = vmatpush1.bf16.xpose.msra.mxu0 %v292
    %310 = vmatprep.subr.bf16.mxu0 0
    %311 = vmatpush2.bf16.xpose.msra.mxu0 0
    %312 = vmatprep.subr.bf16.mxu0 0
    %313 = vmatpush2.bf16.xpose.msra.mxu0 0
    %314 = vmatprep.subr.bf16.mxu0 0
    %315 = vmatpush2.bf16.xpose.msra.mxu0 0
    %316 = vmatprep.subr.bf16.mxu0 0
    %317 = vmatpush2.bf16.xpose.msra.mxu0 0
    %318 = vmatprep.subr.bf16.mxu0 0
    %319 = vmatpush2.bf16.xpose.msra.mxu0 0
    %320 = vmatprep.subr.bf16.mxu0 0
    %321 = vmatpush2.bf16.xpose.msra.mxu0 0
    %322 = vmatprep.subr.bf16.mxu0 0
    %323 = vmatpush2.bf16.xpose.msra.mxu0 0
    %324 = vmatprep.subr.bf16.mxu0 0
    %325 = vmatpush2.bf16.xpose.msra.mxu0 0
    %326 = vmatprep.mubr.bf16.mxu0 0
    %327 = vmatmul.mubr.bf16.gmra.mxu0 %v289
    %v328 = vpop.f32.mrf.mxu0
    %v329 = vadd.f32 0.0, %v328
    %v330 = vpop.f32.mrf.mxu0
    %v331 = vpop.f32.mrf.mxu0
    %v332 = vpop.f32.mrf.mxu0
    %333 = vdwg.mxu0
    %v335 = vsel %vm287, %v274, 0
    %v338 = vsel %vm287, %v280, 0
    %340 = vmatprep.subr.bf16.mxu0 0
    %341 = vmatpush1.bf16.xpose.msra.mxu0 0
    %342 = vmatprep.subr.bf16.mxu0 0
    %343 = vmatpush1.bf16.xpose.msra.mxu0 0
    %344 = vmatprep.subr.bf16.mxu0 0
    %345 = vmatpush1.bf16.xpose.msra.mxu0 0
    %346 = vmatprep.subr.bf16.mxu0 0
    %347 = vmatpush1.bf16.xpose.msra.mxu0 0
    %348 = vmatprep.subr.bf16.mxu0 0
    %349 = vmatpush1.bf16.xpose.msra.mxu0 0
    %350 = vmatprep.subr.bf16.mxu0 0
    %351 = vmatpush1.bf16.xpose.msra.mxu0 0
    %352 = vmatprep.subr.bf16.mxu0 0
    %353 = vmatpush1.bf16.xpose.msra.mxu0 0
    %354 = vmatprep.subr.bf16.mxu0 0
    %355 = vmatpush1.bf16.xpose.msra.mxu0 %v338
    %356 = vmatprep.subr.bf16.mxu0 0
    %357 = vmatpush2.bf16.xpose.msra.mxu0 0
    %358 = vmatprep.subr.bf16.mxu0 0
    %359 = vmatpush2.bf16.xpose.msra.mxu0 0
    %360 = vmatprep.subr.bf16.mxu0 0
    %361 = vmatpush2.bf16.xpose.msra.mxu0 0
    %362 = vmatprep.subr.bf16.mxu0 0
    %363 = vmatpush2.bf16.xpose.msra.mxu0 0
    %364 = vmatprep.subr.bf16.mxu0 0
    %365 = vmatpush2.bf16.xpose.msra.mxu0 0
    %366 = vmatprep.subr.bf16.mxu0 0
    %367 = vmatpush2.bf16.xpose.msra.mxu0 0
    %368 = vmatprep.subr.bf16.mxu0 0
    %369 = vmatpush2.bf16.xpose.msra.mxu0 0
    %370 = vmatprep.subr.bf16.mxu0 0
    %371 = vmatpush2.bf16.xpose.msra.mxu0 0
    %372 = vmatprep.mubr.bf16.mxu0 0
    %373 = vmatmul.mubr.bf16.gmra.mxu0 %v335
    %v374 = vpop.f32.mrf.mxu0
    %v375 = vadd.f32 0.0, %v374
    %v376 = vpop.f32.mrf.mxu0
    %v377 = vpop.f32.mrf.mxu0
    %v378 = vpop.f32.mrf.mxu0
    %379 = vdwg.mxu0
    %v380 = vmul.f32 %v329, 0.35355338
    %v381 = vmul.f32 %v375, 0.35355338
    %v382 = vsel %vm287, %v380, -inf
    %383 = vmax.xlane.f32.xlu0 %v382
    %v384 = vpop.xlane.xlu0 %383
    %v385 = vsel %vm287, %v381, -inf
    %386 = vmax.xlane.f32.xlu0 %v385
    %v387 = vpop.xlane.xlu0 %386
    %v388 = vsub.f32 %v380, %v384
    %v389 = vsub.f32 %v381, %v387
    %v390 = vmul.f32 %v388, 1.442695
    %v391 = vpow.pop %v390
    %v392 = vmul.f32 %v389, 1.442695
    %v393 = vpow.pop %v392
    %v394 = vsel %vm287, %v391, 0.0
    %395 = vadd.xlane.f32.xlu0 %v394
    %v396 = vpop.xlane.xlu0 %395
    %v397 = vsel %vm287, %v393, 0.0
    %398 = vadd.xlane.f32.xlu0 %v397
    %v399 = vpop.xlane.xlu0 %398
    %v400 = vrcp.pop %v396
    %v401 = vrcp.pop %v399
    %v402 = vmul.f32 %v391, %v400
    %v403 = vmul.f32 %v393, %v401
    %v404 = vpack.c.bf16 %v402, %v402
    %v405 = vpack.c.bf16 %v403, %v403
    %v407 = vsel %vm287, %v404, 0
    %vm409 = vcmask 1043456
    %v411 = vsel %vm409, %v285, 0
    %413 = vmatprep.subr.bf16.mxu0 0
    %414 = vmatpush1.bf16.msra.mxu0 0
    %415 = vmatprep.subr.bf16.mxu0 0
    %416 = vmatpush1.bf16.msra.mxu0 0
    %417 = vmatprep.subr.bf16.mxu0 0
    %418 = vmatpush1.bf16.msra.mxu0 0
    %419 = vmatprep.subr.bf16.mxu0 0
    %420 = vmatpush1.bf16.msra.mxu0 0
    %421 = vmatprep.subr.bf16.mxu0 0
    %422 = vmatpush1.bf16.msra.mxu0 0
    %423 = vmatprep.subr.bf16.mxu0 0
    %424 = vmatpush1.bf16.msra.mxu0 0
    %425 = vmatprep.subr.bf16.mxu0 0
    %426 = vmatpush1.bf16.msra.mxu0 0
    %427 = vmatprep.subr.bf16.mxu0 0
    %428 = vmatpush1.bf16.msra.mxu0 %v411
    %429 = vmatprep.subr.bf16.mxu0 0
    %430 = vmatpush2.bf16.msra.mxu0 0
    %431 = vmatprep.subr.bf16.mxu0 0
    %432 = vmatpush2.bf16.msra.mxu0 0
    %433 = vmatprep.subr.bf16.mxu0 0
    %434 = vmatpush2.bf16.msra.mxu0 0
    %435 = vmatprep.subr.bf16.mxu0 0
    %436 = vmatpush2.bf16.msra.mxu0 0
    %437 = vmatprep.subr.bf16.mxu0 0
    %438 = vmatpush2.bf16.msra.mxu0 0
    %439 = vmatprep.subr.bf16.mxu0 0
    %440 = vmatpush2.bf16.msra.mxu0 0
    %441 = vmatprep.subr.bf16.mxu0 0
    %442 = vmatpush2.bf16.msra.mxu0 0
    %443 = vmatprep.subr.bf16.mxu0 0
    %444 = vmatpush2.bf16.msra.mxu0 0
    %445 = vmatprep.mubr.bf16.mxu0 0
    %446 = vmatmul.mubr.bf16.gmra.mxu0 %v407
    %v447 = vpop.f32.mrf.mxu0
    %v448 = vadd.f32 0.0, %v447
    %v449 = vpop.f32.mrf.mxu0
    %v450 = vpop.f32.mrf.mxu0
    %v451 = vpop.f32.mrf.mxu0
    %452 = vdwg.mxu0
    %v454 = vsel %vm287, %v405, 0
    %v457 = vsel %vm409, %v286, 0
    %459 = vmatprep.subr.bf16.mxu0 0
    %460 = vmatpush1.bf16.msra.mxu0 0
    %461 = vmatprep.subr.bf16.mxu0 0
    %462 = vmatpush1.bf16.msra.mxu0 0
    %463 = vmatprep.subr.bf16.mxu0 0
    %464 = vmatpush1.bf16.msra.mxu0 0
    %465 = vmatprep.subr.bf16.mxu0 0
    %466 = vmatpush1.bf16.msra.mxu0 0
    %467 = vmatprep.subr.bf16.mxu0 0
    %468 = vmatpush1.bf16.msra.mxu0 0
    %469 = vmatprep.subr.bf16.mxu0 0
    %470 = vmatpush1.bf16.msra.mxu0 0
    %471 = vmatprep.subr.bf16.mxu0 0
    %472 = vmatpush1.bf16.msra.mxu0 0
    %473 = vmatprep.subr.bf16.mxu0 0
    %474 = vmatpush1.bf16.msra.mxu0 %v457
    %475 = vmatprep.subr.bf16.mxu0 0
    %476 = vmatpush2.bf16.msra.mxu0 0
    %477 = vmatprep.subr.bf16.mxu0 0
    %478 = vmatpush2.bf16.msra.mxu0 0
    %479 = vmatprep.subr.bf16.mxu0 0
    %480 = vmatpush2.bf16.msra.mxu0 0
    %481 = vmatprep.subr.bf16.mxu0 0
    %482 = vmatpush2.bf16.msra.mxu0 0
    %483 = vmatprep.subr.bf16.mxu0 0
    %484 = vmatpush2.bf16.msra.mxu0 0
    %485 = vmatprep.subr.bf16.mxu0 0
    %486 = vmatpush2.bf16.msra.mxu0 0
    %487 = vmatprep.subr.bf16.mxu0 0
    %488 = vmatpush2.bf16.msra.mxu0 0
    %489 = vmatprep.subr.bf16.mxu0 0
    %490 = vmatpush2.bf16.msra.mxu0 0
    %491 = vmatprep.mubr.bf16.mxu0 0
    %492 = vmatmul.mubr.bf16.gmra.mxu0 %v454
    %v493 = vpop.f32.mrf.mxu0
    %v494 = vadd.f32 0.0, %v493
    %v495 = vpop.f32.mrf.mxu0
    %v496 = vpop.f32.mrf.mxu0
    %v497 = vpop.f32.mrf.mxu0
    %498 = vdwg.mxu0
    %499 = vst.msk [vmem:[#allocation2] sm:$0xff] %vm287, %v448
    %500 = vst.msk [vmem:[#allocation2 + $0x8] sm:$0xff] %vm287, %v494
    %501 = vrot.lane.b32.xlu0 %v273, 120
    %v502 = vpop.permute.xlu0 %501
    %503 = vrot.lane.b32.xlu0 %v279, 120
    %v504 = vpop.permute.xlu0 %503
    %v506 = vsel %vm287, %v502, 0
    %v509 = vsel %vm287, %v504, 0
    %511 = vmatprep.subr.bf16.mxu0 0
    %512 = vmatpush1.bf16.xpose.msra.mxu0 0
    %513 = vmatprep.subr.bf16.mxu0 0
    %514 = vmatpush1.bf16.xpose.msra.mxu0 0
    %515 = vmatprep.subr.bf16.mxu0 0
    %516 = vmatpush1.bf16.xpose.msra.mxu0 0
    %517 = vmatprep.subr.bf16.mxu0 0
    %518 = vmatpush1.bf16.xpose.msra.mxu0 0
    %519 = vmatprep.subr.bf16.mxu0 0
    %520 = vmatpush1.bf16.xpose.msra.mxu0 0
    %521 = vmatprep.subr.bf16.mxu0 0
    %522 = vmatpush1.bf16.xpose.msra.mxu0 0
    %523 = vmatprep.subr.bf16.mxu0 0
    %524 = vmatpush1.bf16.xpose.msra.mxu0 0
    %525 = vmatprep.subr.bf16.mxu0 0
    %526 = vmatpush1.bf16.xpose.msra.mxu0 %v509
    %527 = vmatprep.subr.bf16.mxu0 0
    %528 = vmatpush2.bf16.xpose.msra.mxu0 0
    %529 = vmatprep.subr.bf16.mxu0 0
    %530 = vmatpush2.bf16.xpose.msra.mxu0 0
    %531 = vmatprep.subr.bf16.mxu0 0
    %532 = vmatpush2.bf16.xpose.msra.mxu0 0
    %533 = vmatprep.subr.bf16.mxu0 0
    %534 = vmatpush2.bf16.xpose.msra.mxu0 0
    %535 = vmatprep.subr.bf16.mxu0 0
    %536 = vmatpush2.bf16.xpose.msra.mxu0 0
    %537 = vmatprep.subr.bf16.mxu0 0
    %538 = vmatpush2.bf16.xpose.msra.mxu0 0
    %539 = vmatprep.subr.bf16.mxu0 0
    %540 = vmatpush2.bf16.xpose.msra.mxu0 0
    %541 = vmatprep.subr.bf16.mxu0 0
    %542 = vmatpush2.bf16.xpose.msra.mxu0 0
    %543 = vmatprep.mubr.bf16.mxu0 0
    %544 = vmatmul.mubr.bf16.gmra.mxu0 %v506
    %v545 = vpop.f32.mrf.mxu0
    %v546 = vadd.f32 0.0, %v545
    %v547 = vpop.f32.mrf.mxu0
    %v548 = vpop.f32.mrf.mxu0
    %v549 = vpop.f32.mrf.mxu0
    %550 = vdwg.mxu0
    %551 = vrot.lane.b32.xlu0 %v274, 120
    %v552 = vpop.permute.xlu0 %551
    %553 = vrot.lane.b32.xlu0 %v280, 120
    %v554 = vpop.permute.xlu0 %553
    %v556 = vsel %vm287, %v552, 0
    %v559 = vsel %vm287, %v554, 0
    %561 = vmatprep.subr.bf16.mxu0 0
    %562 = vmatpush1.bf16.xpose.msra.mxu0 0
    %563 = vmatprep.subr.bf16.mxu0 0
    %564 = vmatpush1.bf16.xpose.msra.mxu0 0
    %565 = vmatprep.subr.bf16.mxu0 0
    %566 = vmatpush1.bf16.xpose.msra.mxu0 0
    %567 = vmatprep.subr.bf16.mxu0 0
    %568 = vmatpush1.bf16.xpose.msra.mxu0 0
    %569 = vmatprep.subr.bf16.mxu0 0
    %570 = vmatpush1.bf16.xpose.msra.mxu0 0
    %571 = vmatprep.subr.bf16.mxu0 0
    %572 = vmatpush1.bf16.xpose.msra.mxu0 0
    %573 = vmatprep.subr.bf16.mxu0 0
    %574 = vmatpush1.bf16.xpose.msra.mxu0 0
    %575 = vmatprep.subr.bf16.mxu0 0
    %576 = vmatpush1.bf16.xpose.msra.mxu0 %v559
    %577 = vmatprep.subr.bf16.mxu0 0
    %578 = vmatpush2.bf16.xpose.msra.mxu0 0
    %579 = vmatprep.subr.bf16.mxu0 0
    %580 = vmatpush2.bf16.xpose.msra.mxu0 0
    %581 = vmatprep.subr.bf16.mxu0 0
    %582 = vmatpush2.bf16.xpose.msra.mxu0 0
    %583 = vmatprep.subr.bf16.mxu0 0
    %584 = vmatpush2.bf16.xpose.msra.mxu0 0
    %585 = vmatprep.subr.bf16.mxu0 0
    %586 = vmatpush2.bf16.xpose.msra.mxu0 0
    %587 = vmatprep.subr.bf16.mxu0 0
    %588 = vmatpush2.bf16.xpose.msra.mxu0 0
    %589 = vmatprep.subr.bf16.mxu0 0
    %590 = vmatpush2.bf16.xpose.msra.mxu0 0
    %591 = vmatprep.subr.bf16.mxu0 0
    %592 = vmatpush2.bf16.xpose.msra.mxu0 0
    %593 = vmatprep.mubr.bf16.mxu0 0
    %594 = vmatmul.mubr.bf16.gmra.mxu0 %v556
    %v595 = vpop.f32.mrf.mxu0
    %v596 = vadd.f32 0.0, %v595
    %v597 = vpop.f32.mrf.mxu0
    %v598 = vpop.f32.mrf.mxu0
    %v599 = vpop.f32.mrf.mxu0
    %600 = vdwg.mxu0
    %v601 = vmul.f32 %v546, 0.35355338
    %v602 = vmul.f32 %v596, 0.35355338
    %v603 = vsel %vm287, %v601, -inf
    %604 = vmax.xlane.f32.xlu0 %v603
    %v605 = vpop.xlane.xlu0 %604
    %v606 = vsel %vm287, %v602, -inf
    %607 = vmax.xlane.f32.xlu0 %v606
    %v608 = vpop.xlane.xlu0 %607
    %v609 = vsub.f32 %v601, %v605
    %v610 = vsub.f32 %v602, %v608
    %v611 = vmul.f32 %v609, 1.442695
    %v612 = vpow.pop %v611
    %v613 = vmul.f32 %v610, 1.442695
    %v614 = vpow.pop %v613
    %v615 = vsel %vm287, %v612, 0.0
    %616 = vadd.xlane.f32.xlu0 %v615
    %v617 = vpop.xlane.xlu0 %616
    %v618 = vsel %vm287, %v614, 0.0
    %619 = vadd.xlane.f32.xlu0 %v618
    %v620 = vpop.xlane.xlu0 %619
    %v621 = vrcp.pop %v617
    %v622 = vrcp.pop %v620
    %v623 = vmul.f32 %v612, %v621
    %v624 = vmul.f32 %v614, %v622
    %v625 = vpack.c.bf16 %v623, %v623
    %v626 = vpack.c.bf16 %v624, %v624
    %627 = vrot.lane.b32.xlu0 %v285, 120
    %v628 = vpop.permute.xlu0 %627
    %v630 = vsel %vm287, %v625, 0
    %v633 = vsel %vm409, %v628, 0
    %635 = vmatprep.subr.bf16.mxu0 0
    %636 = vmatpush1.bf16.msra.mxu0 0
    %637 = vmatprep.subr.bf16.mxu0 0
    %638 = vmatpush1.bf16.msra.mxu0 0
    %639 = vmatprep.subr.bf16.mxu0 0
    %640 = vmatpush1.bf16.msra.mxu0 0
    %641 = vmatprep.subr.bf16.mxu0 0
    %642 = vmatpush1.bf16.msra.mxu0 0
    %643 = vmatprep.subr.bf16.mxu0 0
    %644 = vmatpush1.bf16.msra.mxu0 0
    %645 = vmatprep.subr.bf16.mxu0 0
    %646 = vmatpush1.bf16.msra.mxu0 0
    %647 = vmatprep.subr.bf16.mxu0 0
    %648 = vmatpush1.bf16.msra.mxu0 0
    %649 = vmatprep.subr.bf16.mxu0 0
    %650 = vmatpush1.bf16.msra.mxu0 %v633
    %651 = vmatprep.subr.bf16.mxu0 0
    %652 = vmatpush2.bf16.msra.mxu0 0
    %653 = vmatprep.subr.bf16.mxu0 0
    %654 = vmatpush2.bf16.msra.mxu0 0
    %655 = vmatprep.subr.bf16.mxu0 0
    %656 = vmatpush2.bf16.msra.mxu0 0
    %657 = vmatprep.subr.bf16.mxu0 0
    %658 = vmatpush2.bf16.msra.mxu0 0
    %659 = vmatprep.subr.bf16.mxu0 0
    %660 = vmatpush2.bf16.msra.mxu0 0
    %661 = vmatprep.subr.bf16.mxu0 0
    %662 = vmatpush2.bf16.msra.mxu0 0
    %663 = vmatprep.subr.bf16.mxu0 0
    %664 = vmatpush2.bf16.msra.mxu0 0
    %665 = vmatprep.subr.bf16.mxu0 0
    %666 = vmatpush2.bf16.msra.mxu0 0
    %667 = vmatprep.mubr.bf16.mxu0 0
    %668 = vmatmul.mubr.bf16.gmra.mxu0 %v630
    %v669 = vpop.f32.mrf.mxu0
    %v670 = vadd.f32 0.0, %v669
    %v671 = vpop.f32.mrf.mxu0
    %v672 = vpop.f32.mrf.mxu0
    %v673 = vpop.f32.mrf.mxu0
    %674 = vdwg.mxu0
    %675 = vrot.lane.b32.xlu0 %v286, 120
    %v676 = vpop.permute.xlu0 %675
    %v678 = vsel %vm287, %v626, 0
    %v681 = vsel %vm409, %v676, 0
    %683 = vmatprep.subr.bf16.mxu0 0
    %684 = vmatpush1.bf16.msra.mxu0 0
    %685 = vmatprep.subr.bf16.mxu0 0
    %686 = vmatpush1.bf16.msra.mxu0 0
    %687 = vmatprep.subr.bf16.mxu0 0
    %688 = vmatpush1.bf16.msra.mxu0 0
    %689 = vmatprep.subr.bf16.mxu0 0
    %690 = vmatpush1.bf16.msra.mxu0 0
    %691 = vmatprep.subr.bf16.mxu0 0
    %692 = vmatpush1.bf16.msra.mxu0 0
    %693 = vmatprep.subr.bf16.mxu0 0
    %694 = vmatpush1.bf16.msra.mxu0 0
    %695 = vmatprep.subr.bf16.mxu0 0
    %696 = vmatpush1.bf16.msra.mxu0 0
    %697 = vmatprep.subr.bf16.mxu0 0
    %698 = vmatpush1.bf16.msra.mxu0 %v681
    %699 = vmatprep.subr.bf16.mxu0 0
    %700 = vmatpush2.bf16.msra.mxu0 0
    %701 = vmatprep.subr.bf16.mxu0 0
    %702 = vmatpush2.bf16.msra.mxu0 0
    %703 = vmatprep.subr.bf16.mxu0 0
    %704 = vmatpush2.bf16.msra.mxu0 0
    %705 = vmatprep.subr.bf16.mxu0 0
    %706 = vmatpush2.bf16.msra.mxu0 0
    %707 = vmatprep.subr.bf16.mxu0 0
    %708 = vmatpush2.bf16.msra.mxu0 0
    %709 = vmatprep.subr.bf16.mxu0 0
    %710 = vmatpush2.bf16.msra.mxu0 0
    %711 = vmatprep.subr.bf16.mxu0 0
    %712 = vmatpush2.bf16.msra.mxu0 0
    %713 = vmatprep.subr.bf16.mxu0 0
    %714 = vmatpush2.bf16.msra.mxu0 0
    %715 = vmatprep.mubr.bf16.mxu0 0
    %716 = vmatmul.mubr.bf16.gmra.mxu0 %v678
    %v717 = vpop.f32.mrf.mxu0
    %v718 = vadd.f32 0.0, %v717
    %v719 = vpop.f32.mrf.mxu0
    %v720 = vpop.f32.mrf.mxu0
    %v721 = vpop.f32.mrf.mxu0
    %722 = vdwg.mxu0
    %725 = vrot.lane.b32.xlu0 %v670, 8
    %v726 = vpop.permute.xlu0 %725
    %727 = vrot.lane.b32.xlu0 %v718, 8
    %v728 = vpop.permute.xlu0 %727
    %vm731 = vcmask 130112
    %732 = vst.msk [vmem:[#allocation2] sm:$0xff] %vm731, %v726
    %733 = vst.msk [vmem:[#allocation2 + $0x8] sm:$0xff] %vm731, %v728
    %734 = vrot.lane.b32.xlu0 %v273, 112
    %v735 = vpop.permute.xlu0 %734
    %736 = vrot.lane.b32.xlu0 %v279, 112
    %v737 = vpop.permute.xlu0 %736
    %v739 = vsel %vm287, %v735, 0
    %v742 = vsel %vm287, %v737, 0
    %744 = vmatprep.subr.bf16.mxu0 0
    %745 = vmatpush1.bf16.xpose.msra.mxu0 0
    %746 = vmatprep.subr.bf16.mxu0 0
    %747 = vmatpush1.bf16.xpose.msra.mxu0 0
    %748 = vmatprep.subr.bf16.mxu0 0
    %749 = vmatpush1.bf16.xpose.msra.mxu0 0
    %750 = vmatprep.subr.bf16.mxu0 0
    %751 = vmatpush1.bf16.xpose.msra.mxu0 0
    %752 = vmatprep.subr.bf16.mxu0 0
    %753 = vmatpush1.bf16.xpose.msra.mxu0 0
    %754 = vmatprep.subr.bf16.mxu0 0
    %755 = vmatpush1.bf16.xpose.msra.mxu0 0
    %756 = vmatprep.subr.bf16.mxu0 0
    %757 = vmatpush1.bf16.xpose.msra.mxu0 0
    %758 = vmatprep.subr.bf16.mxu0 0
    %759 = vmatpush1.bf16.xpose.msra.mxu0 %v742
    %760 = vmatprep.subr.bf16.mxu0 0
    %761 = vmatpush2.bf16.xpose.msra.mxu0 0
    %762 = vmatprep.subr.bf16.mxu0 0
    %763 = vmatpush2.bf16.xpose.msra.mxu0 0
    %764 = vmatprep.subr.bf16.mxu0 0
    %765 = vmatpush2.bf16.xpose.msra.mxu0 0
    %766 = vmatprep.subr.bf16.mxu0 0
    %767 = vmatpush2.bf16.xpose.msra.mxu0 0
    %768 = vmatprep.subr.bf16.mxu0 0
    %769 = vmatpush2.bf16.xpose.msra.mxu0 0
    %770 = vmatprep.subr.bf16.mxu0 0
    %771 = vmatpush2.bf16.xpose.msra.mxu0 0
    %772 = vmatprep.subr.bf16.mxu0 0
    %773 = vmatpush2.bf16.xpose.msra.mxu0 0
    %774 = vmatprep.subr.bf16.mxu0 0
    %775 = vmatpush2.bf16.xpose.msra.mxu0 0
    %776 = vmatprep.mubr.bf16.mxu0 0
    %777 = vmatmul.mubr.bf16.gmra.mxu0 %v739
    %v778 = vpop.f32.mrf.mxu0
    %v779 = vadd.f32 0.0, %v778
    %v780 = vpop.f32.mrf.mxu0
    %v781 = vpop.f32.mrf.mxu0
    %v782 = vpop.f32.mrf.mxu0
    %783 = vdwg.mxu0
    %784 = vrot.lane.b32.xlu0 %v274, 112
    %v785 = vpop.permute.xlu0 %784
    %786 = vrot.lane.b32.xlu0 %v280, 112
    %v787 = vpop.permute.xlu0 %786
    %v789 = vsel %vm287, %v785, 0
    %v792 = vsel %vm287, %v787, 0
    %794 = vmatprep.subr.bf16.mxu0 0
    %795 = vmatpush1.bf16.xpose.msra.mxu0 0
    %796 = vmatprep.subr.bf16.mxu0 0
    %797 = vmatpush1.bf16.xpose.msra.mxu0 0
    %798 = vmatprep.subr.bf16.mxu0 0
    %799 = vmatpush1.bf16.xpose.msra.mxu0 0
    %800 = vmatprep.subr.bf16.mxu0 0
    %801 = vmatpush1.bf16.xpose.msra.mxu0 0
    %802 = vmatprep.subr.bf16.mxu0 0
    %803 = vmatpush1.bf16.xpose.msra.mxu0 0
    %804 = vmatprep.subr.bf16.mxu0 0
    %805 = vmatpush1.bf16.xpose.msra.mxu0 0
    %806 = vmatprep.subr.bf16.mxu0 0
    %807 = vmatpush1.bf16.xpose.msra.mxu0 0
    %808 = vmatprep.subr.bf16.mxu0 0
    %809 = vmatpush1.bf16.xpose.msra.mxu0 %v792
    %810 = vmatprep.subr.bf16.mxu0 0
    %811 = vmatpush2.bf16.xpose.msra.mxu0 0
    %812 = vmatprep.subr.bf16.mxu0 0
    %813 = vmatpush2.bf16.xpose.msra.mxu0 0
    %814 = vmatprep.subr.bf16.mxu0 0
    %815 = vmatpush2.bf16.xpose.msra.mxu0 0
    %816 = vmatprep.subr.bf16.mxu0 0
    %817 = vmatpush2.bf16.xpose.msra.mxu0 0
    %818 = vmatprep.subr.bf16.mxu0 0
    %819 = vmatpush2.bf16.xpose.msra.mxu0 0
    %820 = vmatprep.subr.bf16.mxu0 0
    %821 = vmatpush2.bf16.xpose.msra.mxu0 0
    %822 = vmatprep.subr.bf16.mxu0 0
    %823 = vmatpush2.bf16.xpose.msra.mxu0 0
    %824 = vmatprep.subr.bf16.mxu0 0
    %825 = vmatpush2.bf16.xpose.msra.mxu0 0
    %826 = vmatprep.mubr.bf16.mxu0 0
    %827 = vmatmul.mubr.bf16.gmra.mxu0 %v789
    %v828 = vpop.f32.mrf.mxu0
    %v829 = vadd.f32 0.0, %v828
    %v830 = vpop.f32.mrf.mxu0
    %v831 = vpop.f32.mrf.mxu0
    %v832 = vpop.f32.mrf.mxu0
    %833 = vdwg.mxu0
    %v834 = vmul.f32 %v779, 0.35355338
    %v835 = vmul.f32 %v829, 0.35355338
    %v836 = vsel %vm287, %v834, -inf
    %837 = vmax.xlane.f32.xlu0 %v836
    %v838 = vpop.xlane.xlu0 %837
    %v839 = vsel %vm287, %v835, -inf
    %840 = vmax.xlane.f32.xlu0 %v839
    %v841 = vpop.xlane.xlu0 %840
    %v842 = vsub.f32 %v834, %v838
    %v843 = vsub.f32 %v835, %v841
    %v844 = vmul.f32 %v842, 1.442695
    %v845 = vpow.pop %v844
    %v846 = vmul.f32 %v843, 1.442695
    %v847 = vpow.pop %v846
    %v848 = vsel %vm287, %v845, 0.0
    %849 = vadd.xlane.f32.xlu0 %v848
    %v850 = vpop.xlane.xlu0 %849
    %v851 = vsel %vm287, %v847, 0.0
    %852 = vadd.xlane.f32.xlu0 %v851
    %v853 = vpop.xlane.xlu0 %852
    %v854 = vrcp.pop %v850
    %v855 = vrcp.pop %v853
    %v856 = vmul.f32 %v845, %v854
    %v857 = vmul.f32 %v847, %v855
    %v858 = vpack.c.bf16 %v856, %v856
    %v859 = vpack.c.bf16 %v857, %v857
    %860 = vrot.lane.b32.xlu0 %v285, 112
    %v861 = vpop.permute.xlu0 %860
    %v863 = vsel %vm287, %v858, 0
    %v866 = vsel %vm409, %v861, 0
    %868 = vmatprep.subr.bf16.mxu0 0
    %869 = vmatpush1.bf16.msra.mxu0 0
    %870 = vmatprep.subr.bf16.mxu0 0
    %871 = vmatpush1.bf16.msra.mxu0 0
    %872 = vmatprep.subr.bf16.mxu0 0
    %873 = vmatpush1.bf16.msra.mxu0 0
    %874 = vmatprep.subr.bf16.mxu0 0
    %875 = vmatpush1.bf16.msra.mxu0 0
    %876 = vmatprep.subr.bf16.mxu0 0
    %877 = vmatpush1.bf16.msra.mxu0 0
    %878 = vmatprep.subr.bf16.mxu0 0
    %879 = vmatpush1.bf16.msra.mxu0 0
    %880 = vmatprep.subr.bf16.mxu0 0
    %881 = vmatpush1.bf16.msra.mxu0 0
    %882 = vmatprep.subr.bf16.mxu0 0
    %883 = vmatpush1.bf16.msra.mxu0 %v866
    %884 = vmatprep.subr.bf16.mxu0 0
    %885 = vmatpush2.bf16.msra.mxu0 0
    %886 = vmatprep.subr.bf16.mxu0 0
    %887 = vmatpush2.bf16.msra.mxu0 0
    %888 = vmatprep.subr.bf16.mxu0 0
    %889 = vmatpush2.bf16.msra.mxu0 0
    %890 = vmatprep.subr.bf16.mxu0 0
    %891 = vmatpush2.bf16.msra.mxu0 0
    %892 = vmatprep.subr.bf16.mxu0 0
    %893 = vmatpush2.bf16.msra.mxu0 0
    %894 = vmatprep.subr.bf16.mxu0 0
    %895 = vmatpush2.bf16.msra.mxu0 0
    %896 = vmatprep.subr.bf16.mxu0 0
    %897 = vmatpush2.bf16.msra.mxu0 0
    %898 = vmatprep.subr.bf16.mxu0 0
    %899 = vmatpush2.bf16.msra.mxu0 0
    %900 = vmatprep.mubr.bf16.mxu0 0
    %901 = vmatmul.mubr.bf16.gmra.mxu0 %v863
    %v902 = vpop.f32.mrf.mxu0
    %v903 = vadd.f32 0.0, %v902
    %v904 = vpop.f32.mrf.mxu0
    %v905 = vpop.f32.mrf.mxu0
    %v906 = vpop.f32.mrf.mxu0
    %907 = vdwg.mxu0
    %908 = vrot.lane.b32.xlu0 %v286, 112
    %v909 = vpop.permute.xlu0 %908
    %v911 = vsel %vm287, %v859, 0
    %v914 = vsel %vm409, %v909, 0
    %916 = vmatprep.subr.bf16.mxu0 0
    %917 = vmatpush1.bf16.msra.mxu0 0
    %918 = vmatprep.subr.bf16.mxu0 0
    %919 = vmatpush1.bf16.msra.mxu0 0
    %920 = vmatprep.subr.bf16.mxu0 0
    %921 = vmatpush1.bf16.msra.mxu0 0
    %922 = vmatprep.subr.bf16.mxu0 0
    %923 = vmatpush1.bf16.msra.mxu0 0
    %924 = vmatprep.subr.bf16.mxu0 0
    %925 = vmatpush1.bf16.msra.mxu0 0
    %926 = vmatprep.subr.bf16.mxu0 0
    %927 = vmatpush1.bf16.msra.mxu0 0
    %928 = vmatprep.subr.bf16.mxu0 0
    %929 = vmatpush1.bf16.msra.mxu0 0
    %930 = vmatprep.subr.bf16.mxu0 0
    %931 = vmatpush1.bf16.msra.mxu0 %v914
    %932 = vmatprep.subr.bf16.mxu0 0
    %933 = vmatpush2.bf16.msra.mxu0 0
    %934 = vmatprep.subr.bf16.mxu0 0
    %935 = vmatpush2.bf16.msra.mxu0 0
    %936 = vmatprep.subr.bf16.mxu0 0
    %937 = vmatpush2.bf16.msra.mxu0 0
    %938 = vmatprep.subr.bf16.mxu0 0
    %939 = vmatpush2.bf16.msra.mxu0 0
    %940 = vmatprep.subr.bf16.mxu0 0
    %941 = vmatpush2.bf16.msra.mxu0 0
    %942 = vmatprep.subr.bf16.mxu0 0
    %943 = vmatpush2.bf16.msra.mxu0 0
    %944 = vmatprep.subr.bf16.mxu0 0
    %945 = vmatpush2.bf16.msra.mxu0 0
    %946 = vmatprep.subr.bf16.mxu0 0
    %947 = vmatpush2.bf16.msra.mxu0 0
    %948 = vmatprep.mubr.bf16.mxu0 0
    %949 = vmatmul.mubr.bf16.gmra.mxu0 %v911
    %v950 = vpop.f32.mrf.mxu0
    %v951 = vadd.f32 0.0, %v950
    %v952 = vpop.f32.mrf.mxu0
    %v953 = vpop.f32.mrf.mxu0
    %v954 = vpop.f32.mrf.mxu0
    %955 = vdwg.mxu0
    %958 = vrot.lane.b32.xlu0 %v903, 16
    %v959 = vpop.permute.xlu0 %958
    %960 = vrot.lane.b32.xlu0 %v951, 16
    %v961 = vpop.permute.xlu0 %960
    %vm964 = vcmask 195712
    %965 = vst.msk [vmem:[#allocation2] sm:$0xff] %vm964, %v959
    %966 = vst.msk [vmem:[#allocation2 + $0x8] sm:$0xff] %vm964, %v961
    %967 = vrot.lane.b32.xlu0 %v273, 104
    %v968 = vpop.permute.xlu0 %967
    %969 = vrot.lane.b32.xlu0 %v279, 104
    %v970 = vpop.permute.xlu0 %969
    %v972 = vsel %vm287, %v968, 0
    %v975 = vsel %vm287, %v970, 0
    %977 = vmatprep.subr.bf16.mxu0 0
    %978 = vmatpush1.bf16.xpose.msra.mxu0 0
    %979 = vmatprep.subr.bf16.mxu0 0
    %980 = vmatpush1.bf16.xpose.msra.mxu0 0
    %981 = vmatprep.subr.bf16.mxu0 0
    %982 = vmatpush1.bf16.xpose.msra.mxu0 0
    %983 = vmatprep.subr.bf16.mxu0 0
    %984 = vmatpush1.bf16.xpose.msra.mxu0 0
    %985 = vmatprep.subr.bf16.mxu0 0
    %986 = vmatpush1.bf16.xpose.msra.mxu0 0
    %987 = vmatprep.subr.bf16.mxu0 0
    %988 = vmatpush1.bf16.xpose.msra.mxu0 0
    %989 = vmatprep.subr.bf16.mxu0 0
    %990 = vmatpush1.bf16.xpose.msra.mxu0 0
    %991 = vmatprep.subr.bf16.mxu0 0
    %992 = vmatpush1.bf16.xpose.msra.mxu0 %v975
    %993 = vmatprep.subr.bf16.mxu0 0
    %994 = vmatpush2.bf16.xpose.msra.mxu0 0
    %995 = vmatprep.subr.bf16.mxu0 0
    %996 = vmatpush2.bf16.xpose.msra.mxu0 0
    %997 = vmatprep.subr.bf16.mxu0 0
    %998 = vmatpush2.bf16.xpose.msra.mxu0 0
    %999 = vmatprep.subr.bf16.mxu0 0
    %1000 = vmatpush2.bf16.xpose.msra.mxu0 0
    %1001 = vmatprep.subr.bf16.mxu0 0
    %1002 = vmatpush2.bf16.xpose.msra.mxu0 0
    %1003 = vmatprep.subr.bf16.mxu0 0
    %1004 = vmatpush2.bf16.xpose.msra.mxu0 0
    %1005 = vmatprep.subr.bf16.mxu0 0
    %1006 = vmatpush2.bf16.xpose.msra.mxu0 0
    %1007 = vmatprep.subr.bf16.mxu0 0
    %1008 = vmatpush2.bf16.xpose.msra.mxu0 0
    %1009 = vmatprep.mubr.bf16.mxu0 0
    %1010 = vmatmul.mubr.bf16.gmra.mxu0 %v972
    %v1011 = vpop.f32.mrf.mxu0
    %v1012 = vadd.f32 0.0, %v1011
    %v1013 = vpop.f32.mrf.mxu0
    %v1014 = vpop.f32.mrf.mxu0
    %v1015 = vpop.f32.mrf.mxu0
    %1016 = vdwg.mxu0
    %1017 = vrot.lane.b32.xlu0 %v274, 104
    %v1018 = vpop.permute.xlu0 %1017
    %1019 = vrot.lane.b32.xlu0 %v280, 104
    %v1020 = vpop.permute.xlu0 %1019
    %v1022 = vsel %vm287, %v1018, 0
    %v1025 = vsel %vm287, %v1020, 0
    %1027 = vmatprep.subr.bf16.mxu0 0
    %1028 = vmatpush1.bf16.xpose.msra.mxu0 0
    %1029 = vmatprep.subr.bf16.mxu0 0
    %1030 = vmatpush1.bf16.xpose.msra.mxu0 0
    %1031 = vmatprep.subr.bf16.mxu0 0
    %1032 = vmatpush1.bf16.xpose.msra.mxu0 0
    %1033 = vmatprep.subr.bf16.mxu0 0
    %1034 = vmatpush1.bf16.xpose.msra.mxu0 0
    %1035 = vmatprep.subr.bf16.mxu0 0
    %1036 = vmatpush1.bf16.xpose.msra.mxu0 0
    %1037 = vmatprep.subr.bf16.mxu0 0
    %1038 = vmatpush1.bf16.xpose.msra.mxu0 0
    %1039 = vmatprep.subr.bf16.mxu0 0
    %1040 = vmatpush1.bf16.xpose.msra.mxu0 0
    %1041 = vmatprep.subr.bf16.mxu0 0
    %1042 = vmatpush1.bf16.xpose.msra.mxu0 %v1025
    %1043 = vmatprep.subr.bf16.mxu0 0
    %1044 = vmatpush2.bf16.xpose.msra.mxu0 0
    %1045 = vmatprep.subr.bf16.mxu0 0
    %1046 = vmatpush2.bf16.xpose.msra.mxu0 0
    %1047 = vmatprep.subr.bf16.mxu0 0
    %1048 = vmatpush2.bf16.xpose.msra.mxu0 0
    %1049 = vmatprep.subr.bf16.mxu0 0
    %1050 = vmatpush2.bf16.xpose.msra.mxu0 0
    %1051 = vmatprep.subr.bf16.mxu0 0
    %1052 = vmatpush2.bf16.xpose.msra.mxu0 0
    %1053 = vmatprep.subr.bf16.mxu0 0
    %1054 = vmatpush2.bf16.xpose.msra.mxu0 0
    %1055 = vmatprep.subr.bf16.mxu0 0
    %1056 = vmatpush2.bf16.xpose.msra.mxu0 0
    %1057 = vmatprep.subr.bf16.mxu0 0
    %1058 = vmatpush2.bf16.xpose.msra.mxu0 0
    %1059 = vmatprep.mubr.bf16.mxu0 0
    %1060 = vmatmul.mubr.bf16.gmra.mxu0 %v1022
    %v1061 = vpop.f32.mrf.mxu0
    %v1062 = vadd.f32 0.0, %v1061
    %v1063 = vpop.f32.mrf.mxu0
    %v1064 = vpop.f32.mrf.mxu0
    %v1065 = vpop.f32.mrf.mxu0
    %1066 = vdwg.mxu0
    %v1067 = vmul.f32 %v1012, 0.35355338
    %v1068 = vmul.f32 %v1062, 0.35355338
    %v1069 = vsel %vm287, %v1067, -inf
    %1070 = vmax.xlane.f32.xlu0 %v1069
    %v1071 = vpop.xlane.xlu0 %1070
    %v1072 = vsel %vm287, %v1068, -inf
    %1073 = vmax.xlane.f32.xlu0 %v1072
    %v1074 = vpop.xlane.xlu0 %1073
    %v1075 = vsub.f32 %v1067, %v1071
    %v1076 = vsub.f32 %v1068, %v1074
    %v1077 = vmul.f32 %v1075, 1.442695
    %v1078 = vpow.pop %v1077
    %v1079 = vmul.f32 %v1076, 1.442695
    %v1080 = vpow.pop %v1079
    %v1081 = vsel %vm287, %v1078, 0.0
    %1082 = vadd.xlane.f32.xlu0 %v1081
    %v1083 = vpop.xlane.xlu0 %1082
    %v1084 = vsel %vm287, %v1080, 0.0
    %1085 = vadd.xlane.f32.xlu0 %v1084
    %v1086 = vpop.xlane.xlu0 %1085
    %v1087 = vrcp.pop %v1083
    %v1088 = vrcp.pop %v1086
    %v1089 = vmul.f32 %v1078, %v1087
    %v1090 = vmul.f32 %v1080, %v1088
    %v1091 = vpack.c.bf16 %v1089, %v1089
    %v1092 = vpack.c.bf16 %v1090, %v1090
    %1093 = vrot.lane.b32.xlu0 %v285, 104
    %v1094 = vpop.permute.xlu0 %1093
    %v1096 = vsel %vm287, %v1091, 0
    %v1099 = vsel %vm409, %v1094, 0
    %1101 = vmatprep.subr.bf16.mxu0 0
    %1102 = vmatpush1.bf16.msra.mxu0 0
    %1103 = vmatprep.subr.bf16.mxu0 0
    %1104 = vmatpush1.bf16.msra.mxu0 0
    %1105 = vmatprep.subr.bf16.mxu0 0
    %1106 = vmatpush1.bf16.msra.mxu0 0
    %1107 = vmatprep.subr.bf16.mxu0 0
    %1108 = vmatpush1.bf16.msra.mxu0 0
    %1109 = vmatprep.subr.bf16.mxu0 0
    %1110 = vmatpush1.bf16.msra.mxu0 0
    %1111 = vmatprep.subr.bf16.mxu0 0
    %1112 = vmatpush1.bf16.msra.mxu0 0
    %1113 = vmatprep.subr.bf16.mxu0 0
    %1114 = vmatpush1.bf16.msra.mxu0 0
    %1115 = vmatprep.subr.bf16.mxu0 0
    %1116 = vmatpush1.bf16.msra.mxu0 %v1099
    %1117 = vmatprep.subr.bf16.mxu0 0
    %1118 = vmatpush2.bf16.msra.mxu0 0
    %1119 = vmatprep.subr.bf16.mxu0 0
    %1120 = vmatpush2.bf16.msra.mxu0 0
    %1121 = vmatprep.subr.bf16.mxu0 0
    %1122 = vmatpush2.bf16.msra.mxu0 0
    %1123 = vmatprep.subr.bf16.mxu0 0
    %1124 = vmatpush2.bf16.msra.mxu0 0
    %1125 = vmatprep.subr.bf16.mxu0 0
    %1126 = vmatpush2.bf16.msra.mxu0 0
    %1127 = vmatprep.subr.bf16.mxu0 0
    %1128 = vmatpush2.bf16.msra.mxu0 0
    %1129 = vmatprep.subr.bf16.mxu0 0
    %1130 = vmatpush2.bf16.msra.mxu0 0
    %1131 = vmatprep.subr.bf16.mxu0 0
    %1132 = vmatpush2.bf16.msra.mxu0 0
    %1133 = vmatprep.mubr.bf16.mxu0 0
    %1134 = vmatmul.mubr.bf16.gmra.mxu0 %v1096
    %v1135 = vpop.f32.mrf.mxu0
    %v1136 = vadd.f32 0.0, %v1135
    %v1137 = vpop.f32.mrf.mxu0
    %v1138 = vpop.f32.mrf.mxu0
    %v1139 = vpop.f32.mrf.mxu0
    %1140 = vdwg.mxu0
    %1141 = vrot.lane.b32.xlu0 %v286, 104
    %v1142 = vpop.permute.xlu0 %1141
    %v1144 = vsel %vm287, %v1092, 0
    %v1147 = vsel %vm409, %v1142, 0
    %1149 = vmatprep.subr.bf16.mxu0 0
    %1150 = vmatpush1.bf16.msra.mxu0 0
    %1151 = vmatprep.subr.bf16.mxu0 0
    %1152 = vmatpush1.bf16.msra.mxu0 0
    %1153 = vmatprep.subr.bf16.mxu0 0
    %1154 = vmatpush1.bf16.msra.mxu0 0
    %1155 = vmatprep.subr.bf16.mxu0 0
    %1156 = vmatpush1.bf16.msra.mxu0 0
    %1157 = vmatprep.subr.bf16.mxu0 0
    %1158 = vmatpush1.bf16.msra.mxu0 0
    %1159 = vmatprep.subr.bf16.mxu0 0
    %1160 = vmatpush1.bf16.msra.mxu0 0
    %1161 = vmatprep.subr.bf16.mxu0 0
    %1162 = vmatpush1.bf16.msra.mxu0 0
    %1163 = vmatprep.subr.bf16.mxu0 0
    %1164 = vmatpush1.bf16.msra.mxu0 %v1147
    %1165 = vmatprep.subr.bf16.mxu0 0
    %1166 = vmatpush2.bf16.msra.mxu0 0
    %1167 = vmatprep.subr.bf16.mxu0 0
    %1168 = vmatpush2.bf16.msra.mxu0 0
    %1169 = vmatprep.subr.bf16.mxu0 0
    %1170 = vmatpush2.bf16.msra.mxu0 0
    %1171 = vmatprep.subr.bf16.mxu0 0
    %1172 = vmatpush2.bf16.msra.mxu0 0
    %1173 = vmatprep.subr.bf16.mxu0 0
    %1174 = vmatpush2.bf16.msra.mxu0 0
    %1175 = vmatprep.subr.bf16.mxu0 0
    %1176 = vmatpush2.bf16.msra.mxu0 0
    %1177 = vmatprep.subr.bf16.mxu0 0
    %1178 = vmatpush2.bf16.msra.mxu0 0
    %1179 = vmatprep.subr.bf16.mxu0 0
    %1180 = vmatpush2.bf16.msra.mxu0 0
    %1181 = vmatprep.mubr.bf16.mxu0 0
    %1182 = vmatmul.mubr.bf16.gmra.mxu0 %v1144
    %v1183 = vpop.f32.mrf.mxu0
    %v1184 = vadd.f32 0.0, %v1183
    %v1185 = vpop.f32.mrf.mxu0
    %v1186 = vpop.f32.mrf.mxu0
    %v1187 = vpop.f32.mrf.mxu0
    %1188 = vdwg.mxu0
    %1191 = vrot.lane.b32.xlu0 %v1136, 24
    %v1192 = vpop.permute.xlu0 %1191
    %1193 = vrot.lane.b32.xlu0 %v1184, 24
    %v1194 = vpop.permute.xlu0 %1193
    %vm1197 = vcmask 261312
    %1198 = vst.msk [vmem:[#allocation2] sm:$0xff] %vm1197, %v1192
    %1199 = vst.msk [vmem:[#allocation2 + $0x8] sm:$0xff] %vm1197, %v1194
    %v1200 = vld [vmem:[#allocation2] sm:$0xff]
    %v1201 = vld [vmem:[#allocation2 + $0x8] sm:$0xff]
    %v1202 = vpack.c.bf16 %v1201, %v1200
    %v1203 = vld [vmem:[%s9] sm:$0xf]
    %v1204 = vld [vmem:[%s9 + $0x4] sm:$0xf]
    %v1205 = vld [vmem:[%s9 + $0x8] sm:$0xf]
    %v1206 = vld [vmem:[%s9 + $0xc] sm:$0xf]
    %v1207 = vld [vmem:[%s10] sm:$0x1]
    %v1209 = vlaneseq
    %v1210 = vshrl.u32 %v1209, 7
    %v1211 = vsub.s32 0, %v1210
    %v1212 = vrot.slane %v1207, %v1211
    %v1218 = vunpack.c.l.b16 %v1203
    %v1219 = vunpack.c.l.b16 %v1204
    %v1220 = vunpack.c.l.b16 %v1205
    %v1221 = vunpack.c.l.b16 %v1206
    %v1222 = vpack.c.b16 %v1219, %v1218
    %v1223 = vpack.c.b16 %v1221, %v1220
    %v1227 = vsel %vm76, %v1202, 0
    %1229 = vmatprep.subr.bf16.mxu0 0
    %1230 = vmatpush1.bf16.msra.mxu0 0
    %1231 = vmatprep.subr.bf16.mxu0 0
    %1232 = vmatpush1.bf16.msra.mxu0 0
    %1233 = vmatprep.subr.bf16.mxu0 0
    %1234 = vmatpush1.bf16.msra.mxu0 0
    %1235 = vmatprep.subr.bf16.mxu0 0
    %1236 = vmatpush1.bf16.msra.mxu0 0
    %1237 = vmatprep.subr.bf16.mxu0 0
    %1238 = vmatpush1.bf16.msra.mxu0 0
    %1239 = vmatprep.subr.bf16.mxu0 0
    %1240 = vmatpush1.bf16.msra.mxu0 0
    %1241 = vmatprep.subr.bf16.mxu0 0
    %1242 = vmatpush1.bf16.msra.mxu0 %v1223
    %1243 = vmatprep.subr.bf16.mxu0 0
    %1244 = vmatpush1.bf16.msra.mxu0 %v1222
    %1245 = vmatprep.subr.bf16.mxu0 0
    %1246 = vmatpush2.bf16.msra.mxu0 0
    %1247 = vmatprep.subr.bf16.mxu0 0
    %1248 = vmatpush2.bf16.msra.mxu0 0
    %1249 = vmatprep.subr.bf16.mxu0 0
    %1250 = vmatpush2.bf16.msra.mxu0 0
    %1251 = vmatprep.subr.bf16.mxu0 0
    %1252 = vmatpush2.bf16.msra.mxu0 0
    %1253 = vmatprep.subr.bf16.mxu0 0
    %1254 = vmatpush2.bf16.msra.mxu0 0
    %1255 = vmatprep.subr.bf16.mxu0 0
    %1256 = vmatpush2.bf16.msra.mxu0 0
    %1257 = vmatprep.subr.bf16.mxu0 0
    %1258 = vmatpush2.bf16.msra.mxu0 0
    %1259 = vmatprep.subr.bf16.mxu0 0
    %1260 = vmatpush2.bf16.msra.mxu0 0
    %1261 = vmatprep.mubr.bf16.mxu0 0
    %1262 = vmatmul.mubr.bf16.gmra.mxu0 %v1227
    %v1263 = vpop.f32.mrf.mxu0
    %v1264 = vadd.f32 %v1212, %v1263
    %v1265 = vpop.f32.mrf.mxu0
    %v1266 = vpop.f32.mrf.mxu0
    %v1267 = vadd.f32 %v1212, %v1266
    %v1268 = vpop.f32.mrf.mxu0
    %1269 = vdwg.mxu0
    %v1270 = vsel %vm76, %v1264, 0.0
    %1271 = vadd.xlane.f32.xlu0 %v1270
    %v1272 = vpop.xlane.xlu0 %1271
    %v1273 = vsel %vm76, %v1267, 0.0
    %1274 = vadd.xlane.f32.xlu0 %v1273
    %v1275 = vpop.xlane.xlu0 %1274
    %v1276 = vrcp.pop 32.0
    %v1277 = vmul.f32 %v1272, %v1276
    %v1278 = vmul.f32 %v1275, %v1276
    %v1279 = vmul.f32 %v1264, %v1264
    %v1280 = vmul.f32 %v1267, %v1267
    %v1281 = vsel %vm76, %v1279, 0.0
    %1282 = vadd.xlane.f32.xlu0 %v1281
    %v1283 = vpop.xlane.xlu0 %1282
    %v1284 = vsel %vm76, %v1280, 0.0
    %1285 = vadd.xlane.f32.xlu0 %v1284
    %v1286 = vpop.xlane.xlu0 %1285
    %v1287 = vmul.f32 %v1283, %v1276
    %v1288 = vmul.f32 %v1286, %v1276
    %v1289 = vmul.f32 %v1277, %v1277
    %v1290 = vmul.f32 %v1278, %v1278
    %v1291 = vsub.f32 %v1287, %v1289
    %v1292 = vsub.f32 %v1288, %v1290
    %v1293 = vmax.f32 %v1291, 0.0
    %v1294 = vmax.f32 %v1292, 0.0
    %v1295 = vsub.f32 %v1264, %v1277
    %v1296 = vsub.f32 %v1267, %v1278
    %v1297 = vadd.f32 %v1293, 1e-05
    %v1298 = vadd.f32 %v1294, 1e-05
    %v1299 = vrsqrt.pop %v1297
    %v1300 = vrsqrt.pop %v1298
    %v1301 = vmul.f32 %v1295, %v1299
    %v1302 = vmul.f32 %v1296, %v1300
    %v1303 = vld [vmem:[%s11] sm:$0x1]
    %v1305 = vlaneseq
    %v1306 = vshrl.u32 %v1305, 7
    %v1307 = vsub.s32 0, %v1306
    %v1308 = vrot.slane %v1303, %v1307
    %v1310 = vmul.f32 %v1301, %v1308
    %v1311 = vmul.f32 %v1302, %v1308
    %v1312 = vld [vmem:[%s12] sm:$0x1]
    %v1314 = vlaneseq
    %v1315 = vshrl.u32 %v1314, 7
    %v1316 = vsub.s32 0, %v1315
    %v1317 = vrot.slane %v1312, %v1316
    %v1319 = vadd.f32 %v1310, %v1317
    %v1320 = vadd.f32 %v1311, %v1317
    %1321 = vst.msk [vmem:[#allocation3] sm:$0xff] %vm76, %v1319
    %1322 = vst.msk [vmem:[#allocation3 + $0x8] sm:$0xff] %vm76, %v1320
    // Predicated region
    $region54: #{multi_view_cross_attention.1} parent=1 // pred_check
      _
    $region55: #{multi_view_cross_attention.1} parent=1 // pred_check_branch
      %1324 = sbr.rel (0) target = $region57
    $region56: #{multi_view_cross_attention.1} parent=1 // pred_region
      %s1326 = ssub.s32 256, 256
      %1327 = vsyncadd [#allocation4], %s1326
      %s1328 = sshll.u32 [#allocation3], 4
      %s1329 = int_to_ptr.vmem [resolvable:$true] %s1328
      %1334 = dma.vmem_to_hbm [thread:$0]  %s1329, 256, %s13, [#allocation4], 128, 128, 8
    $region57: #{multi_view_cross_attention.1} parent=1 // pred_fallthru
      _
    // Predicated region
    $region58: #{multi_view_cross_attention.1} parent=1 // pred_check
      _
    $region59: #{multi_view_cross_attention.1} parent=1 // pred_check_branch
      %1336 = sbr.rel (0) target = $region61
    $region60: #{multi_view_cross_attention.1} parent=1 // pred_region
      %1337 = dma.done [#allocation4], 256
    $region61: #{multi_view_cross_attention.1} parent=1 // pred_fallthru
      _
    %1338 = vsyncpa [#allocation4], 1

</llo_original>
